<compile_context>
chip_gen: v7x
topology: tpu7x:2x2x1
jax: 0.10.0
libtpu: 0.0.40
codegen_flags: <defaults>
</compile_context>

<pallas_src>
import functools

import numpy as np
import jax
import jax.numpy as jnp
from jax import lax
from jax.experimental import pallas as pl
from jax.experimental.pallas import tpu as pltpu


def _round_up(x, m):
    return ((x + m - 1) // m) * m


# ----------------------------------------------------------------------------
# Pallas kernels
# ----------------------------------------------------------------------------
def _conv_mm_kernel(*refs, leaky, has_residual):
    # (TM, K) bf16 @ (K, TN) bf16 on the MXU, f32 accumulate; fused BN shift
    # (scale already folded into the weight), LeakyReLU, optional residual add.
    if has_residual:
        p_ref, w_ref, shift_ref, r_ref, o_ref = refs
    else:
        p_ref, w_ref, shift_ref, o_ref = refs
        r_ref = None
    acc = jnp.dot(p_ref[...], w_ref[...], preferred_element_type=jnp.float32)
    y = acc + shift_ref[...]
    if leaky:
        y = jnp.where(y > 0, y, 0.1 * y)
    if r_ref is not None:
        y = y + r_ref[...].astype(jnp.float32)
    o_ref[...] = y.astype(o_ref.dtype)


def conv_matmul_pallas(patches, wmat, shift_row, leaky, residual=None):
    M, K = patches.shape
    Np = wmat.shape[1]                       # already a multiple of 128 (lane-dense)
    TM = 512 if M >= 512 else _round_up(M, 128)
    Mp = _round_up(M, TM)
    TN = 256 if Np % 256 == 0 else 128
    if Mp != M:
        patches = jnp.pad(patches, ((0, Mp - M), (0, 0)))
        if residual is not None:
            residual = jnp.pad(residual, ((0, Mp - M), (0, 0)))
    grid = (Mp // TM, Np // TN)              # j (N) innermost: patch tile stays resident

    in_specs = [
        pl.BlockSpec((TM, K), lambda i, j: (i, 0)),     # patch stream (bf16)
        pl.BlockSpec((K, TN), lambda i, j: (0, j)),     # weight tile  (bf16)
        pl.BlockSpec((1, TN), lambda i, j: (0, j)),     # folded BN shift (f32)
    ]
    args = [patches, wmat, shift_row]
    has_res = residual is not None
    if has_res:
        in_specs.append(pl.BlockSpec((TM, TN), lambda i, j: (i, j)))
        args.append(residual)

    blk_bytes = (TM * K * 2 + K * TN * 2 + TN * 4 + TM * TN * 2
                 + (TM * TN * 2 if has_res else 0))
    vlim = int(min(max(3 * blk_bytes, 8 << 20), 48 << 20))
    bytes_accessed = (Mp * K * 2 + K * Np * 2 + Np * 4 + Mp * Np * 2
                      + (Mp * Np * 2 if has_res else 0))

    out = pl.pallas_call(
        functools.partial(_conv_mm_kernel, leaky=leaky, has_residual=has_res),
        out_shape=jax.ShapeDtypeStruct((Mp, Np), jnp.bfloat16),
        grid=grid,
        in_specs=in_specs,
        out_specs=pl.BlockSpec((TM, TN), lambda i, j: (i, j)),
        compiler_params=pltpu.CompilerParams(
            dimension_semantics=("parallel", "parallel"),
            vmem_limit_bytes=vlim),
        cost_estimate=pl.CostEstimate(flops=2 * Mp * K * Np,
                                      transcendentals=0,
                                      bytes_accessed=bytes_accessed),
    )(*args)
    return out[:M]


def _add_kernel(a_ref, b_ref, o_ref):
    o_ref[...] = a_ref[...] + b_ref[...]


def shortcut_add_pallas(a, b):
    # Fallback residual add (only used when the add cannot be fused into the
    # preceding conv). Lane-dense 512-wide tiles, row-tiled parallel grid.
    orig_shape, dtype, n = a.shape, a.dtype, a.size
    LANE = 512
    rows = -(-n // LANE)
    TR = 256 if rows >= 256 else _round_up(rows, 8)
    rows_p = _round_up(rows, TR)
    pad = rows_p * LANE - n
    a2 = jnp.pad(a.reshape(-1), (0, pad)).reshape(rows_p, LANE)
    b2 = jnp.pad(b.reshape(-1), (0, pad)).reshape(rows_p, LANE)
    out = pl.pallas_call(
        _add_kernel,
        out_shape=jax.ShapeDtypeStruct((rows_p, LANE), dtype),
        grid=(rows_p // TR,),
        in_specs=[pl.BlockSpec((TR, LANE), lambda i: (i, 0)),
                  pl.BlockSpec((TR, LANE), lambda i: (i, 0))],
        out_specs=pl.BlockSpec((TR, LANE), lambda i: (i, 0)),
        compiler_params=pltpu.CompilerParams(dimension_semantics=("parallel",)),
    )(a2, b2)
    return out.reshape(-1)[:n].reshape(orig_shape)


def _detect_kernel(x_ref, o_ref, *, stride, R, na, G, anchors_scaled, TL):
    # Layout: (attrs, lanes) with lane = b*R + r; grid offsets and anchors are
    # generated in-kernel from the lane index (no dense offset/anchor DMAs).
    x = x_ref[...].astype(jnp.float32)
    attr = lax.broadcasted_iota(jnp.int32, x.shape, 0)
    lane = lax.broadcasted_iota(jnp.int32, x.shape, 1) + pl.program_id(0) * TL
    r = lane % R
    cell = r // na
    ai = r % na
    x_off = (cell % G).astype(jnp.float32)
    y_off = (cell // G).astype(jnp.float32)
    aw = jnp.full(x.shape, anchors_scaled[-1][0], jnp.float32)
    ah = jnp.full(x.shape, anchors_scaled[-1][1], jnp.float32)
    for idx in range(na - 1):
        aw = jnp.where(ai == idx, anchors_scaled[idx][0], aw)
        ah = jnp.where(ai == idx, anchors_scaled[idx][1], ah)
    sig = jax.nn.sigmoid(x)
    off = jnp.where(attr == 0, x_off, jnp.where(attr == 1, y_off, 0.0))
    xy = (sig + off) * stride
    is_wh = jnp.logical_or(attr == 2, attr == 3)
    ex = jnp.exp(jnp.where(is_wh, x, 0.0))        # gated exp: no inf in unused rows
    anch = jnp.where(attr == 2, aw, ah)
    wh = ex * anch * stride
    o_ref[...] = jnp.where(attr < 2, xy, jnp.where(attr < 4, wh, sig))


def detection_head_pallas(x_nhwc, img_width, num_class, anchors):
    B, G, _, C = x_nhwc.shape
    stride = img_width // G
    A = 5 + num_class
    na = len(anchors)
    R = G * G * na
    L = B * R

    x = x_nhwc.reshape(B, R, A)                        # (B, rows, attrs)
    x_t = jnp.transpose(x, (2, 0, 1)).reshape(A, L)    # lane-dense (attrs, B*rows)
    TL = 512 if L >= 512 else _round_up(L, 128)
    Lp = _round_up(L, TL)
    if Lp != L:
        x_t = jnp.pad(x_t, ((0, 0), (0, Lp - L)))

    anchors_scaled = tuple((float(w) / stride, float(h) / stride) for (w, h) in anchors)
    kernel = functools.partial(_detect_kernel, stride=float(stride), R=R, na=na,
                               G=G, anchors_scaled=anchors_scaled, TL=TL)
    out = pl.pallas_call(
        kernel,
        out_shape=jax.ShapeDtypeStruct((A, Lp), jnp.float32),
        grid=(Lp // TL,),
        in_specs=[pl.BlockSpec((A, TL), lambda i: (0, i))],
        out_specs=pl.BlockSpec((A, TL), lambda i: (0, i)),
        compiler_params=pltpu.CompilerParams(dimension_semantics=("parallel",)),
    )(x_t)
    out = out[:, :L].reshape(A, B, R)
    return jnp.transpose(out, (1, 2, 0))               # (B, rows, attrs), f32


# ----------------------------------------------------------------------------
# JAX glue (NHWC residency, bf16 activations)
# ----------------------------------------------------------------------------
def im2col_nhwc(x_nhwc, k, stride, pad):
    B, H, W, C = x_nhwc.shape
    if pad:
        x_nhwc = jnp.pad(x_nhwc, ((0, 0), (pad, pad), (pad, pad), (0, 0)))
    Hp, Wp = H + 2 * pad, W + 2 * pad
    Ho = (Hp - k) // stride + 1
    Wo = (Wp - k) // stride + 1
    cols = []
    for ki in range(k):
        for kj in range(k):
            cols.append(x_nhwc[:, ki:ki + (Ho - 1) * stride + 1:stride,
                               kj:kj + (Wo - 1) * stride + 1:stride, :])
    patches = jnp.stack(cols, axis=3)                   # (B, Ho, Wo, k*k, C)
    patches = patches.reshape(B * Ho * Wo, k * k * C)   # K ordered (ki, kj, c)
    return patches, Ho, Wo


def conv_bn_act_pallas(x_nhwc, layer, residual=None):
    B = x_nhwc.shape[0]
    k, stride, pad = layer['k'], layer['stride'], layer['pad']
    Cout = layer['cout']
    x_nhwc = x_nhwc.astype(jnp.bfloat16)
    if k == 1 and pad == 0:
        # 1x1 fast path: no im2col, patches are just an NHWC reshape.
        xs = x_nhwc[:, ::stride, ::stride, :] if stride > 1 else x_nhwc
        Ho, Wo = xs.shape[1], xs.shape[2]
        patches = xs.reshape(B * Ho * Wo, xs.shape[3])
    else:
        patches, Ho, Wo = im2col_nhwc(x_nhwc, k, stride, pad)
    res2 = None
    if residual is not None:
        Np = layer['wmat'].shape[1]
        res2 = residual.astype(jnp.bfloat16).reshape(B * Ho * Wo, Cout)
        if Np != Cout:
            res2 = jnp.pad(res2, ((0, 0), (0, Np - Cout)))
    out = conv_matmul_pallas(patches, layer['wmat'], layer['shift_row'],
                             layer['leaky'], residual=res2)
    return out[:, :Cout].reshape(B, Ho, Wo, Cout)


def _interp_matrix_np(n_in, n_out):
    # Static (trace-time) bilinear interpolation matrix, align_corners=True.
    if n_in == 1:
        return jnp.ones((n_out, 1), jnp.float32)
    pos = np.arange(n_out, dtype=np.float64) * (n_in - 1) / (n_out - 1)
    lo = np.clip(np.floor(pos).astype(np.int64), 0, n_in - 2)
    w = (pos - lo).astype(np.float32)
    M = np.zeros((n_out, n_in), np.float32)
    M[np.arange(n_out), lo] += 1.0 - w
    M[np.arange(n_out), lo + 1] += w
    return jnp.asarray(M)


def bilinear_upsample(x_nhwc, scale):
    # nn.functional.interpolate(mode='bilinear', align_corners=True), NHWC.
    B, H, W, C = x_nhwc.shape
    Ho, Wo = H * scale, W * scale
    Mh = _interp_matrix_np(H, Ho)
    Mw = _interp_matrix_np(W, Wo)
    y = jnp.einsum('oh,bhwc->bowc', Mh, x_nhwc.astype(jnp.float32))
    y = jnp.einsum('bhwc,pw->bhpc', y, Mw)
    return y.astype(x_nhwc.dtype)


def _detection_grids(grid_size, stride, anchors):
    na = len(anchors)
    g = np.arange(grid_size)
    a, b = np.meshgrid(g, g)                           # same as the torch code
    xy = np.stack([a.reshape(-1), b.reshape(-1)], axis=1).astype(np.float32)
    xy = np.repeat(xy, na, axis=0)                     # (G*G*na, 2)
    anch = np.array([(w / stride, h / stride) for (w, h) in anchors], np.float32)
    anch = np.tile(anch, (grid_size * grid_size, 1))   # (G*G*na, 2)
    return xy, anch


# ----------------------------------------------------------------------------
# Model definition (in-script "cfg"), deterministic parameter init
# ----------------------------------------------------------------------------
ANCHORS = ((10, 13), (16, 30), (33, 23), (30, 61), (62, 45),
           (59, 119), (116, 90), (156, 198), (373, 326))

BLOCKS = [
    {'name': 'net', 'width': 32, 'height': 32, 'channels': 3},
    {'name': 'convolutional', 'batch_normalize': 1, 'filters': 8,  'size': 3, 'stride': 1, 'pad': 1, 'activation': 'leaky'},   # 0
    {'name': 'convolutional', 'batch_normalize': 1, 'filters': 16, 'size': 3, 'stride': 2, 'pad': 1, 'activation': 'leaky'},   # 1
    {'name': 'convolutional', 'batch_normalize': 1, 'filters': 8,  'size': 1, 'stride': 1, 'pad': 1, 'activation': 'leaky'},   # 2
    {'name': 'convolutional', 'batch_normalize': 1, 'filters': 16, 'size': 3, 'stride': 1, 'pad': 1, 'activation': 'leaky'},   # 3
    {'name': 'shortcut', 'from': -3, 'activation': 'linear'},                                                                   # 4
    {'name': 'convolutional', 'batch_normalize': 1, 'filters': 32, 'size': 3, 'stride': 2, 'pad': 1, 'activation': 'leaky'},   # 5
    {'name': 'convolutional', 'filters': 255, 'size': 1, 'stride': 1, 'pad': 1, 'activation': 'linear'},                       # 6 (pre-yolo)
    {'name': 'yolo', 'mask': '3,4,5', 'num': 9, 'jitter': 0.3, 'ignore_thresh': 0.7, 'truth_thresh': 1, 'random': 1},          # 7
    {'name': 'route', 'layers': -3},                                                                                            # 8
    {'name': 'convolutional', 'batch_normalize': 1, 'filters': 16, 'size': 1, 'stride': 1, 'pad': 1, 'activation': 'leaky'},   # 9
    {'name': 'upsample', 'stride': 2},                                                                                          # 10
    {'name': 'route', 'layers': '-1, 4'},                                                                                       # 11
    {'name': 'convolutional', 'filters': 255, 'size': 1, 'stride': 1, 'pad': 1, 'activation': 'linear'},                       # 12 (pre-yolo)
    {'name': 'yolo', 'mask': '0,1,2', 'num': 9, 'jitter': 0.3, 'ignore_thresh': 0.7, 'truth_thresh': 1, 'random': 1},          # 13
]


def plan_fusions(layers):
    # Fuse shortcut adds into the preceding conv's epilogue when the pre-add
    # activation is not referenced by anything except that shortcut.
    refs = {}
    for idx, layer in enumerate(layers):
        kind = layer['kind']
        if kind == 'shortcut':
            refs.setdefault(idx + layer['start'], set()).add(idx)
            refs.setdefault(idx - 1, set()).add(idx)
        elif kind == 'route':
            refs.setdefault(idx + layer['start'], set()).add(idx)
            if layer['end'] is not None:
                refs.setdefault(idx + layer['end'], set()).add(idx)
        else:
            if idx > 0:
                refs.setdefault(idx - 1, set()).add(idx)   # implicit x = prev output
    for idx, layer in enumerate(layers):
        if (layer['kind'] == 'shortcut' and idx >= 1
                and layers[idx - 1]['kind'] == 'convolutional'
                and 0 <= idx + layer['start'] <= idx - 2
                and refs.get(idx - 1, set()) <= {idx}):
            layers[idx - 1]['fuse_from'] = idx + layer['start']
            layer['fused'] = True


def build_yolov3(key, blocks, num_class, anchors):
    net_info = blocks[0]
    layers, size_list = [], []
    prev_c = net_info['channels']
    for index, block in enumerate(blocks[1:]):
        name = block['name']
        next_name = blocks[index + 2]['name'] if index + 2 < len(blocks) else None
        if name == 'convolutional':
            c_out = 3 * (num_class + 5) if next_name == 'yolo' else block['filters']
            k, stride = block['size'], block['stride']
            pad = (k - 1) // 2 if block['pad'] else 0
            bn = bool(block.get('batch_normalize'))
            key, k1, k2, k3, k4, k5 = jax.random.split(key, 6)
            W = 0.1 * jax.random.normal(k1, (c_out, prev_c, k, k), jnp.float32)
            if bn:
                gamma = jax.random.uniform(k2, (c_out,), jnp.float32, 0.5, 1.5)
                beta = 0.1 * jax.random.normal(k3, (c_out,), jnp.float32)
                mean = 0.1 * jax.random.normal(k4, (c_out,), jnp.float32)
                var = jax.random.uniform(k5, (c_out,), jnp.float32, 0.5, 1.5)
                inv = gamma / jnp.sqrt(var + 1e-5)         # eval-mode BN folding
                scale, shift = inv, beta - mean * inv
            else:
                bias = 0.1 * jax.random.normal(k2, (c_out,), jnp.float32)
                scale, shift = jnp.ones((c_out,), jnp.float32), bias
            W_eff = W * scale[:, None, None, None]         # fold BN scale into weight
            Kdim = k * k * prev_c
            Np = _round_up(c_out, 128)                     # lane-dense output channels
            wmat = jnp.transpose(W_eff, (2, 3, 1, 0)).reshape(Kdim, c_out)
            wmat = jnp.pad(wmat, ((0, 0), (0, Np - c_out))).astype(jnp.bfloat16)
            shift_row = jnp.pad(shift, (0, Np - c_out)).reshape(1, Np).astype(jnp.float32)
            layers.append(dict(kind='convolutional', W=W_eff, shift=shift,
                               wmat=wmat, shift_row=shift_row, cout=c_out,
                               k=k, stride=stride, pad=pad,
                               leaky=(block.get('activation') == 'leaky')))
            out_c = c_out
        elif name == 'upsample':
            layers.append(dict(kind='upsample', stride=block['stride']))
            out_c = prev_c
        elif name == 'shortcut':
            frm = block['from']
            if frm > 0:
                frm -= index
            layers.append(dict(kind='shortcut', start=frm))
            out_c = prev_c
        elif name == 'route':
            _layers = block['layers']
            ls = [_layers] if isinstance(_layers, int) else [int(t.strip()) for t in _layers.split(',')]
            ls = [(x - index) if x > 0 else x for x in ls]
            start, end = ls[0], (ls[1] if len(ls) == 2 else None)
            layers.append(dict(kind='route', start=start, end=end))
            out_c = size_list[start + index] + (size_list[end + index] if end is not None else 0)
        elif name == 'yolo':
            mask = tuple(int(t.strip()) for t in block['mask'].split(','))
            used = tuple(anchors[i] for i in mask)
            layers.append(dict(kind='yolo', anchors=used))
            out_c = prev_c
        else:
            raise ValueError(name)
        size_list.append(out_c)
        prev_c = out_c
    plan_fusions(layers)
    return net_info, layers


def yolov3_forward(x_nchw, layers, img_width, num_class,
                   conv_fn=conv_bn_act_pallas,
                   add_fn=shortcut_add_pallas,
                   detect_fn=detection_head_pallas):
    # NHWC residency for the whole network; bf16 activations in HBM.
    x = jnp.transpose(x_nchw, (0, 2, 3, 1)).astype(jnp.bfloat16)
    outputs, preds = [], []
    for index, layer in enumerate(layers):
        kind = layer['kind']
        if kind == 'convolutional':
            res = outputs[layer['fuse_from']] if layer.get('fuse_from') is not None else None
            x = conv_fn(x, layer, res)
        elif kind == 'upsample':
            x = bilinear_upsample(x, layer['stride'])
        elif kind == 'shortcut':
            if layer.get('fused'):
                x = outputs[index - 1]           # add already fused into the conv
            else:
                x = add_fn(outputs[index + layer['start']], outputs[index - 1])
        elif kind == 'route':
            if layer['end'] is None:
                x = outputs[index + layer['start']]
            else:
                x = jnp.concatenate([outputs[index + layer['start']],
                                     outputs[index + layer['end']]], axis=-1)
        elif kind == 'yolo':
            x = detect_fn(x, img_width, num_class, layer['anchors'])
            preds.append(x)
        outputs.append(x)
    return jnp.concatenate(preds, axis=1)


# ----------------------------------------------------------------------------
# Pure-JAX reference (same bf16-operand / f32-accumulate math; checks kernels)
# ----------------------------------------------------------------------------
def conv_ref(x_nhwc, layer, residual=None):
    w = jnp.transpose(layer['W'], (2, 3, 1, 0)).astype(jnp.bfloat16)   # HWIO
    y = lax.conv_general_dilated(
        x_nhwc.astype(jnp.bfloat16), w,
        window_strides=(layer['stride'], layer['stride']),
        padding=[(layer['pad'], layer['pad'])] * 2,
        dimension_numbers=('NHWC', 'HWIO', 'NHWC'),
        preferred_element_type=jnp.float32)
    y = y + layer['shift'][None, None, None, :]
    if layer['leaky']:
        y = jnp.where(y > 0, y, 0.1 * y)
    if residual is not None:
        y = y + residual.astype(jnp.float32)
    return y.astype(jnp.bfloat16)


def detect_ref(x_nhwc, img_width, num_class, anchors):
    B, G, _, C = x_nhwc.shape
    stride = img_width // G
    A = 5 + num_class
    na = len(anchors)
    x = x_nhwc.astype(jnp.float32).reshape(B, G * G * na, A)
    xy, anch = _detection_grids(G, stride, anchors)
    xy, anch = jnp.asarray(xy)[None], jnp.asarray(anch)[None]
    sxy = jax.nn.sigmoid(x[..., 0:2])
    bxy = (sxy + xy) * stride
    bwh = (jnp.exp(x[..., 2:4]) * anch) * stride
    so = jax.nn.sigmoid(x[..., 4:5])
    sc = jax.nn.sigmoid(x[..., 5:])
    return jnp.concatenate([bxy, bwh, so, sc], axis=-1)


# ----------------------------------------------------------------------------
if __name__ == "__main__":
    name_tuple = ('cat', 'dog', 'bird')       # num_class = 3 -> 3*(3+5)=24 det channels
    num_class = len(name_tuple)
    key = jax.random.PRNGKey(0)
    key, pkey, xkey = jax.random.split(key, 3)

    net_info, layers = build_yolov3(pkey, BLOCKS, num_class, ANCHORS)
    img_width = net_info['width']

    x = jax.random.normal(xkey, (2, 3, img_width, img_width), jnp.float32)  # NCHW

    out = yolov3_forward(x, layers, img_width, num_class)
    out = jax.block_until_ready(out)

    # correctness check vs. plain-JAX reference (identical bf16/f32 math)
    ref = yolov3_forward(x, layers, img_width, num_class,
                         conv_fn=conv_ref, add_fn=lambda a, b: a + b,
                         detect_fn=detect_ref)
    ref = jax.block_until_ready(ref)

    assert out.shape == (2, 8 * 8 * 3 + 16 * 16 * 3, 5 + num_class), out.shape
    np.testing.assert_allclose(np.asarray(out), np.asarray(ref), rtol=5e-3, atol=5e-3)
    print("KERNEL_OK")
</pallas_src>

<mosaic_0001>
module attributes {stable_mosaic.version = 11 : i64} {
  func.func @_conv_mm_kernel(%arg0: i32, %arg1: i32, %arg2: memref<512x27xbf16, #tpu.memory_space<vmem>>, %arg3: memref<27x128xbf16, #tpu.memory_space<vmem>>, %arg4: memref<1x128xf32, #tpu.memory_space<vmem>>, %arg5: memref<512x128xbf16, #tpu.memory_space<vmem>>) attributes {dimension_semantics = [#tpu.dimension_semantics<parallel>, #tpu.dimension_semantics<parallel>], iteration_bounds = array<i64: 4, 1>, scalar_prefetch = 0 : i64, scratch_operands = 0 : i64, tpu.core_type = #tpu.core_type<tc>, window_params = [{transform_indices = @transform_0, window_bounds = array<i64: 512, 27>}, {transform_indices = @transform_1, window_bounds = array<i64: 27, 128>}, {transform_indices = @transform_2, window_bounds = array<i64: 1, 128>}, {transform_indices = @transform_3, window_bounds = array<i64: 512, 128>}]} {
    %c0 = arith.constant 0 : index
    %c0_0 = arith.constant 0 : index
    %0 = vector.load %arg2[%c0, %c0_0] : memref<512x27xbf16, #tpu.memory_space<vmem>>, vector<512x27xbf16>
    %c0_1 = arith.constant 0 : index
    %c0_2 = arith.constant 0 : index
    %1 = vector.load %arg3[%c0_1, %c0_2] : memref<27x128xbf16, #tpu.memory_space<vmem>>, vector<27x128xbf16>
    %cst = arith.constant dense<0.000000e+00> : vector<512x128xf32>
    %2 = tpu.matmul %0, %1, %cst {dimension_numbers = #tpu.dot_dimension_numbers<[1], [0], [0], [1], [0, 0, 1, 1], [], []>} : vector<512x27xbf16>, vector<27x128xbf16>, vector<512x128xf32> -> vector<512x128xf32>
    %c0_3 = arith.constant 0 : index
    %c0_4 = arith.constant 0 : index
    %3 = vector.load %arg4[%c0_3, %c0_4] : memref<1x128xf32, #tpu.memory_space<vmem>>, vector<1x128xf32>
    %4 = vector.broadcast %3 : vector<1x128xf32> to vector<512x128xf32>
    %5 = arith.addf %2, %4 : vector<512x128xf32>
    %cst_5 = arith.constant 0.000000e+00 : f32
    %6 = vector.broadcast %cst_5 : f32 to vector<512x128xf32>
    %7 = arith.cmpf ogt, %5, %6 : vector<512x128xf32>
    %cst_6 = arith.constant 1.000000e-01 : f32
    %8 = vector.broadcast %cst_6 : f32 to vector<512x128xf32>
    %9 = arith.mulf %8, %5 : vector<512x128xf32>
    %10 = arith.select %7, %5, %9 : vector<512x128xi1>, vector<512x128xf32>
    %11 = arith.truncf %10 : vector<512x128xf32> to vector<512x128xbf16>
    %c0_7 = arith.constant 0 : index
    %c0_8 = arith.constant 0 : index
    %12 = vector.load %arg5[%c0_7, %c0_8] : memref<512x128xbf16, #tpu.memory_space<vmem>>, vector<512x128xbf16>
    tpu.vector_store %arg5[%c0_7, %c0_8], %11 {strides = array<i32>} : memref<512x128xbf16, #tpu.memory_space<vmem>>, vector<512x128xbf16>,
    return
  }
  func.func @transform_0(%arg0: i32, %arg1: i32) -> (i32, i32) {
    %c0_i32 = arith.constant 0 : i32
    %c0_i32_0 = arith.constant 0 : i32
    return %arg0, %c0_i32 : i32, i32
  }
  func.func @transform_1(%arg0: i32, %arg1: i32) -> (i32, i32) {
    %c0_i32 = arith.constant 0 : i32
    %c0_i32_0 = arith.constant 0 : i32
    return %c0_i32, %arg1 : i32, i32
  }
  func.func @transform_2(%arg0: i32, %arg1: i32) -> (i32, i32) {
    %c0_i32 = arith.constant 0 : i32
    %c0_i32_0 = arith.constant 0 : i32
    return %c0_i32, %arg1 : i32, i32
  }
  func.func @transform_3(%arg0: i32, %arg1: i32) -> (i32, i32) {
    %c0_i32 = arith.constant 0 : i32
    return %arg0, %arg1 : i32, i32
  }
}

</mosaic_0001>

<llo_original>
// kernel: tpu_custom_call.1
$region0: #{tpu_custom_call.1}
  #allocation0 [shape = 'u32[]', space=smem, size = 0x4, offset = 0x4, fixed_abs, tag = 'smem constant byte address 0x4 - core index']
  #allocation1 [shape = 'u32[144,128]{1,0:T(1,128)}', space=vmem, size = 0x12000, scoped, tag = 'internal scratch']
  %s0 = inlined_call_operand.vmem [shape: bf16[2048,27], index: 0, kind: input, shape index: {}]
  %s1 = inlined_call_operand.vmem [shape: bf16[27,128], index: 1, kind: input, shape index: {}]
  %s2 = inlined_call_operand.vmem [shape: f32[1,128], index: 2, kind: input, shape index: {}]
  %s3 = inlined_call_operand.hbm [shape: bf16[2048,128], index: 3, kind: output, shape index: {}]
  %s4 = sld [smem:[#allocation0]]
  $region45: #{tpu_custom_call.1} parent=0
    _
  %s6 = ssub.s32 1, %s4
  %s7 = scalar_select 0, %s6, %s4
  $region1: #{tpu_custom_call.1} parent=0
    #allocation2 [shape = 'u8[262144]{0}', space=vmem, size = 0x40000, scoped, tag = 'output window, operand 0']
    #allocation3 [shape = 's32[2]{0}', space=sflag, size = 0x8, scoped, tag = 'scoped memory for tpu_custom_call.1']
    %8 = vsyncpa [#allocation3], 0
    %s9 = scalar_lea.sflag [#allocation3], 1
    %10 = vsyncpa %s9, 0
    loop: start=0, step=1, limit=6
    $region2: #{tpu_custom_call.1} parent=1 // loop_pre_header
      _
    $region3: #{tpu_custom_call.1} parent=1 // loop_header
      %s12 = sphi 0, %s16
      %p13 = scmp.ge.s32.totalorder %s12, 6
      %s19 = sphi 0, %s31
      %s20 = sphi 0, %s27
      %s21 = sphi 0, %s19
      %s22 = sphi 0, %s20
      %s23 = sphi 0, %s21
      %s24 = sphi 0, %s22
      %s34 = sphi 0, %s36
      %s37 = sphi 0, %s34
      %s38 = sphi 0, %s37
      %s54 = sphi 0, %s38
      %s60 = sphi 0, %s62
      %s63 = sphi 0, %s60
      %s64 = sphi 0, %s63
      %s80 = sphi 0, %s64
      %s86 = sphi 0, %s88
      %s89 = sphi 0, %s86
      %s90 = sphi 0, %s89
      %s106 = sphi 0, %s90
      %s114 = sphi 0, %s116
      %s117 = sphi 0, %s114
      %s118 = sphi 0, %s117
      %s134 = sphi 0, %s118
    $region4: #{tpu_custom_call.1} parent=1 // loop_header_branch
      %15 = sbr.rel (%p13) target = $region8
    $region5: #{tpu_custom_call.1} parent=1 // loop_body
      %s17 = ssub.s32 %s12, 1
      %s18 = ssub.s32 %s12, 2
      %s25 = sadd.s32 1, %s20
      %p26 = scmp.ge.s32.totalorder %s25, 1
      %s27 = scalar_select %p26, 0, %s25
      %s28 = sadd.s32 1, %s19
      %s29 = scalar_select %p26, %s28, %s19
      %p30 = scmp.ge.s32.totalorder %s29, 4
      %s31 = scalar_select %p30, 0, %s29
      %s32 = ssub.s32 %s19, %s31
      %p33 = scmp.eq.s32.totalorder %s32, 0
      %s35 = sadd.s32 %s34, 1
      %s36 = scalar_select %p33, %s34, %s35
      %p39 = pneg %p33
      %p40 = scmp.eq.s32.totalorder %s12, 3
      %p41 = por %p39, %p40
      %p42 = scmp.ne.s32.totalorder %s34, %s37
      %p43 = scmp.eq.s32.totalorder %s12, 0
      %p44 = por %p42, %p43
      %p45 = scmp.ne.s32.totalorder %s34, %s37
      %p46 = scmp.eq.s32.totalorder %s17, 3
      %p47 = por %p45, %p46
      %p48 = scmp.ne.s32.totalorder %s37, %s38
      %p49 = scmp.eq.s32.totalorder %s17, 0
      %p50 = por %p48, %p49
      %p51 = scmp.ne.s32.totalorder %s37, %s38
      %p52 = scmp.eq.s32.totalorder %s18, 3
      %p53 = por %p51, %p52
      %p55 = scmp.ne.s32.totalorder %s38, %s54
      %p56 = scmp.eq.s32.totalorder %s18, 0
      %p57 = por %p55, %p56
      %s58 = ssub.s32 %s20, %s27
      %p59 = scmp.eq.s32.totalorder %s58, 0
      %s61 = sadd.s32 %s60, 1
      %s62 = scalar_select %p59, %s60, %s61
      %p65 = pneg %p59
      %p66 = scmp.eq.s32.totalorder %s12, 3
      %p67 = por %p65, %p66
      %p68 = scmp.ne.s32.totalorder %s60, %s63
      %p69 = scmp.eq.s32.totalorder %s12, 0
      %p70 = por %p68, %p69
      %p71 = scmp.ne.s32.totalorder %s60, %s63
      %p72 = scmp.eq.s32.totalorder %s17, 3
      %p73 = por %p71, %p72
      %p74 = scmp.ne.s32.totalorder %s63, %s64
      %p75 = scmp.eq.s32.totalorder %s17, 0
      %p76 = por %p74, %p75
      %p77 = scmp.ne.s32.totalorder %s63, %s64
      %p78 = scmp.eq.s32.totalorder %s18, 3
      %p79 = por %p77, %p78
      %p81 = scmp.ne.s32.totalorder %s64, %s80
      %p82 = scmp.eq.s32.totalorder %s18, 0
      %p83 = por %p81, %p82
      %s84 = ssub.s32 %s20, %s27
      %p85 = scmp.eq.s32.totalorder %s84, 0
      %s87 = sadd.s32 %s86, 1
      %s88 = scalar_select %p85, %s86, %s87
      %p91 = pneg %p85
      %p92 = scmp.eq.s32.totalorder %s12, 3
      %p93 = por %p91, %p92
      %p94 = scmp.ne.s32.totalorder %s86, %s89
      %p95 = scmp.eq.s32.totalorder %s12, 0
      %p96 = por %p94, %p95
      %p97 = scmp.ne.s32.totalorder %s86, %s89
      %p98 = scmp.eq.s32.totalorder %s17, 3
      %p99 = por %p97, %p98
      %p100 = scmp.ne.s32.totalorder %s89, %s90
      %p101 = scmp.eq.s32.totalorder %s17, 0
      %p102 = por %p100, %p101
      %p103 = scmp.ne.s32.totalorder %s89, %s90
      %p104 = scmp.eq.s32.totalorder %s18, 3
      %p105 = por %p103, %p104
      %p107 = scmp.ne.s32.totalorder %s90, %s106
      %p108 = scmp.eq.s32.totalorder %s18, 0
      %p109 = por %p107, %p108
      %s110 = ssub.s32 %s19, %s31
      %s111 = ssub.s32 %s20, %s27
      %s112 = sor.u32 %s110, %s111
      %p113 = scmp.eq.s32.totalorder %s112, 0
      %s115 = sadd.s32 %s114, 1
      %s116 = scalar_select %p113, %s114, %s115
      %p119 = pneg %p113
      %p120 = scmp.eq.s32.totalorder %s12, 3
      %p121 = por %p119, %p120
      %p122 = scmp.ne.s32.totalorder %s114, %s117
      %p123 = scmp.eq.s32.totalorder %s12, 0
      %p124 = por %p122, %p123
      %p125 = scmp.ne.s32.totalorder %s114, %s117
      %p126 = scmp.eq.s32.totalorder %s17, 3
      %p127 = por %p125, %p126
      %p128 = scmp.ne.s32.totalorder %s117, %s118
      %p129 = scmp.eq.s32.totalorder %s17, 0
      %p130 = por %p128, %p129
      %p131 = scmp.ne.s32.totalorder %s117, %s118
      %p132 = scmp.eq.s32.totalorder %s18, 3
      %p133 = por %p131, %p132
      %p135 = scmp.ne.s32.totalorder %s118, %s134
      %p136 = scmp.eq.s32.totalorder %s18, 0
      %p137 = por %p135, %p136
      %p138 = scmp.le.s32.totalorder 1, %s12
      %p139 = scmp.lt.s32.totalorder %s12, 5
      %p140 = pnand %p138, %p139
      %p141 = pneg %p140
      // Predicated region
      $region9: #{tpu_custom_call.1} parent=5 // pred_check
        _
      $region10: #{tpu_custom_call.1} parent=5 // pred_check_branch
        %143 = sbr.rel (%p140) target = $region12
      $region11: #{tpu_custom_call.1} parent=5 // pred_region
        %s144 = ssub.s32 %s12, 1
        // Predicated region
        $region13: #{tpu_custom_call.1} parent=11 // pred_check
          %p145 = pneg %p76
        $region14: #{tpu_custom_call.1} parent=11 // pred_check_branch
          %147 = sbr.rel (%p145) target = $region16
        $region15: #{tpu_custom_call.1} parent=11 // pred_region
          %p148 = scmp.lt.s32.totalorder %s22, 0
          %s149 = scalar_select %p148, %s22, 0
          %s150 = smul.addr %s149, 4
          %s151 = scalar_lea.vmem %s1, %s150
        $region16: #{tpu_custom_call.1} parent=11 // pred_fallthru
          _
        // Predicated region
        $region17: #{tpu_custom_call.1} parent=11 // pred_check
          %p152 = pneg %p102
        $region18: #{tpu_custom_call.1} parent=11 // pred_check_branch
          %154 = sbr.rel (%p152) target = $region20
        $region19: #{tpu_custom_call.1} parent=11 // pred_region
          %p155 = scmp.lt.s32.totalorder %s22, 0
          %s156 = scalar_select %p155, %s22, 0
          %s157 = scalar_lea.vmem %s2, %s156
        $region20: #{tpu_custom_call.1} parent=11 // pred_fallthru
          _
      $region12: #{tpu_custom_call.1} parent=5 // pred_fallthru
        _
      %p158 = scmp.lt.s32.totalorder %s12, 4
      // Predicated region
      $region21: #{tpu_custom_call.1} parent=5 // pred_check
        %p159 = pneg %p158
      $region22: #{tpu_custom_call.1} parent=5 // pred_check_branch
        %161 = sbr.rel (%p159) target = $region24
      $region23: #{tpu_custom_call.1} parent=5 // pred_region
        // Predicated region
        $region25: #{tpu_custom_call.1} parent=23 // pred_check
          %p162 = pneg %p44
        $region26: #{tpu_custom_call.1} parent=23 // pred_check_branch
          %164 = sbr.rel (%p162) target = $region28
        $region27: #{tpu_custom_call.1} parent=23 // pred_region
          %s165 = smul.u32 64, %s19
          %p166 = scmp.lt.s32.totalorder %s165, 255
          %s167 = scalar_select %p166, %s165, 255
          %s168 = smul.addr %s167, 4
          %s169 = scalar_lea.vmem %s0, %s168
          %s170 = smul.u32 64, %s19
        $region28: #{tpu_custom_call.1} parent=23 // pred_fallthru
          _
      $region24: #{tpu_custom_call.1} parent=5 // pred_fallthru
        _
      %p171 = scmp.le.s32.totalorder 1, %s12
      %p172 = scmp.lt.s32.totalorder %s12, 5
      %p173 = pnand %p171, %p172
      %p174 = pneg %p173
      // Predicated region
      $region29: #{tpu_custom_call.1} parent=5 // pred_check
        _
      $region30: #{tpu_custom_call.1} parent=5 // pred_check_branch
        %176 = sbr.rel (%p173) target = $region32
      $region31: #{tpu_custom_call.1} parent=5 // pred_region
        %s177 = ssub.s32 %s12, 1
        %s178 = smul.u32 64, %s21
        %p179 = scmp.lt.s32.totalorder %s178, 255
        %s180 = scalar_select %p179, %s178, 255
        %s181 = smul.addr %s180, 4
        %s182 = scalar_lea.vmem %s0, %s181
        %p183 = pneg %p50
        %p184 = pneg %p47
        %p185 = scmp.lt.s32.totalorder %s22, 0
        %s186 = scalar_select %p185, %s22, 0
        %s187 = smul.addr %s186, 4
        %s188 = scalar_lea.vmem %s1, %s187
        %p189 = pneg %p76
        %p190 = pneg %p73
        %p191 = scmp.lt.s32.totalorder %s22, 0
        %s192 = scalar_select %p191, %s22, 0
        %s193 = scalar_lea.vmem %s2, %s192
        %p194 = pneg %p102
        %p195 = pneg %p99
        %p196 = pneg %p130
        %p197 = pneg %p127
        %s198 = sand.u32 %s117, 1
        %s199 = scalar_lea.sflag [#allocation3], %s198
        %s200 = sand.u32 %s117, 1
        %s201 = smul.addr %s200, 256
        %s202 = scalar_lea.vmem [#allocation2], %s201
        %s203 = smul.u32 64, %s21
        %p204 = scmp.lt.s32.totalorder %s203, 255
        %s205 = scalar_select %p204, %s203, 255
        %s206 = smul.addr %s205, 4
        %s207 = scalar_lea.vmem %s0, %s206
        %s208 = smul.u32 64, %s21
        %p209 = scmp.lt.s32.totalorder %s22, 0
        %s210 = scalar_select %p209, %s22, 0
        %s211 = smul.addr %s210, 4
        %s212 = scalar_lea.vmem %s1, %s211
        %p213 = scmp.lt.s32.totalorder %s22, 0
        %s214 = scalar_select %p213, %s22, 0
        %s215 = scalar_lea.vmem %s2, %s214
        %s216 = smul.u32 64, %s21
        %v218 = vld [vmem:[%s207] sm:$0xf]
        %v219 = vld [vmem:[%s207 + $0x4] sm:$0xf]
        %v220 = vld [vmem:[%s207 + $0x8] sm:$0xf]
        %v221 = vld [vmem:[%s207 + $0xc] sm:$0xf]
        %v222 = vld [vmem:[%s207 + $0x10] sm:$0xf]
        %v223 = vld [vmem:[%s207 + $0x14] sm:$0xf]
        %v224 = vld [vmem:[%s207 + $0x18] sm:$0xf]
        %v225 = vld [vmem:[%s207 + $0x1c] sm:$0xf]
        %v226 = vld [vmem:[%s207 + $0x20] sm:$0xf]
        %v227 = vld [vmem:[%s207 + $0x24] sm:$0xf]
        %v228 = vld [vmem:[%s207 + $0x28] sm:$0xf]
        %v229 = vld [vmem:[%s207 + $0x2c] sm:$0xf]
        %v230 = vld [vmem:[%s207 + $0x30] sm:$0xf]
        %v231 = vld [vmem:[%s207 + $0x34] sm:$0xf]
        %v232 = vld [vmem:[%s207 + $0x38] sm:$0xf]
        %v233 = vld [vmem:[%s207 + $0x3c] sm:$0xf]
        %v234 = vld [vmem:[%s207 + $0x40] sm:$0xf]
        %v235 = vld [vmem:[%s207 + $0x44] sm:$0xf]
        %v236 = vld [vmem:[%s207 + $0x48] sm:$0xf]
        %v237 = vld [vmem:[%s207 + $0x4c] sm:$0xf]
        %v238 = vld [vmem:[%s207 + $0x50] sm:$0xf]
        %v239 = vld [vmem:[%s207 + $0x54] sm:$0xf]
        %v240 = vld [vmem:[%s207 + $0x58] sm:$0xf]
        %v241 = vld [vmem:[%s207 + $0x5c] sm:$0xf]
        %v242 = vld [vmem:[%s207 + $0x60] sm:$0xf]
        %v243 = vld [vmem:[%s207 + $0x64] sm:$0xf]
        %v244 = vld [vmem:[%s207 + $0x68] sm:$0xf]
        %v245 = vld [vmem:[%s207 + $0x6c] sm:$0xf]
        %v246 = vld [vmem:[%s207 + $0x70] sm:$0xf]
        %v247 = vld [vmem:[%s207 + $0x74] sm:$0xf]
        %v248 = vld [vmem:[%s207 + $0x78] sm:$0xf]
        %v249 = vld [vmem:[%s207 + $0x7c] sm:$0xf]
        %v250 = vld [vmem:[%s207 + $0x80] sm:$0xf]
        %v251 = vld [vmem:[%s207 + $0x84] sm:$0xf]
        %v252 = vld [vmem:[%s207 + $0x88] sm:$0xf]
        %v253 = vld [vmem:[%s207 + $0x8c] sm:$0xf]
        %v254 = vld [vmem:[%s207 + $0x90] sm:$0xf]
        %v255 = vld [vmem:[%s207 + $0x94] sm:$0xf]
        %v256 = vld [vmem:[%s207 + $0x98] sm:$0xf]
        %v257 = vld [vmem:[%s207 + $0x9c] sm:$0xf]
        %v258 = vld [vmem:[%s207 + $0xa0] sm:$0xf]
        %v259 = vld [vmem:[%s207 + $0xa4] sm:$0xf]
        %v260 = vld [vmem:[%s207 + $0xa8] sm:$0xf]
        %v261 = vld [vmem:[%s207 + $0xac] sm:$0xf]
        %v262 = vld [vmem:[%s207 + $0xb0] sm:$0xf]
        %v263 = vld [vmem:[%s207 + $0xb4] sm:$0xf]
        %v264 = vld [vmem:[%s207 + $0xb8] sm:$0xf]
        %v265 = vld [vmem:[%s207 + $0xbc] sm:$0xf]
        %v266 = vld [vmem:[%s207 + $0xc0] sm:$0xf]
        %v267 = vld [vmem:[%s207 + $0xc4] sm:$0xf]
        %v268 = vld [vmem:[%s207 + $0xc8] sm:$0xf]
        %v269 = vld [vmem:[%s207 + $0xcc] sm:$0xf]
        %v270 = vld [vmem:[%s207 + $0xd0] sm:$0xf]
        %v271 = vld [vmem:[%s207 + $0xd4] sm:$0xf]
        %v272 = vld [vmem:[%s207 + $0xd8] sm:$0xf]
        %v273 = vld [vmem:[%s207 + $0xdc] sm:$0xf]
        %v274 = vld [vmem:[%s207 + $0xe0] sm:$0xf]
        %v275 = vld [vmem:[%s207 + $0xe4] sm:$0xf]
        %v276 = vld [vmem:[%s207 + $0xe8] sm:$0xf]
        %v277 = vld [vmem:[%s207 + $0xec] sm:$0xf]
        %v278 = vld [vmem:[%s207 + $0xf0] sm:$0xf]
        %v279 = vld [vmem:[%s207 + $0xf4] sm:$0xf]
        %v280 = vld [vmem:[%s207 + $0xf8] sm:$0xf]
        %v281 = vld [vmem:[%s207 + $0xfc] sm:$0xf]
        %v282 = vld [vmem:[%s212] sm:$0xf]
        %v283 = vld [vmem:[%s212 + $0x4] sm:$0xf]
        %v284 = vld [vmem:[%s212 + $0x8] sm:$0xf]
        %v285 = vld [vmem:[%s212 + $0xc] sm:$0x3]
        %v286 = vld [vmem:[%s215] sm:$0x1]
        %v288 = vlaneseq
        %v289 = vshrl.u32 %v288, 7
        %v290 = vsub.s32 0, %v289
        %v291 = vrot.slane %v286, %v290
        %v357 = vunpack.c.l.b16 %v218
        %v358 = vunpack.c.l.b16 %v219
        %v359 = vunpack.c.l.b16 %v220
        %v360 = vunpack.c.l.b16 %v221
        %v361 = vunpack.c.l.b16 %v222
        %v362 = vunpack.c.l.b16 %v223
        %v363 = vunpack.c.l.b16 %v224
        %v364 = vunpack.c.l.b16 %v225
        %v365 = vunpack.c.l.b16 %v226
        %v366 = vunpack.c.l.b16 %v227
        %v367 = vunpack.c.l.b16 %v228
        %v368 = vunpack.c.l.b16 %v229
        %v369 = vunpack.c.l.b16 %v230
        %v370 = vunpack.c.l.b16 %v231
        %v371 = vunpack.c.l.b16 %v232
        %v372 = vunpack.c.l.b16 %v233
        %v373 = vunpack.c.l.b16 %v234
        %v374 = vunpack.c.l.b16 %v235
        %v375 = vunpack.c.l.b16 %v236
        %v376 = vunpack.c.l.b16 %v237
        %v377 = vunpack.c.l.b16 %v238
        %v378 = vunpack.c.l.b16 %v239
        %v379 = vunpack.c.l.b16 %v240
        %v380 = vunpack.c.l.b16 %v241
        %v381 = vunpack.c.l.b16 %v242
        %v382 = vunpack.c.l.b16 %v243
        %v383 = vunpack.c.l.b16 %v244
        %v384 = vunpack.c.l.b16 %v245
        %v385 = vunpack.c.l.b16 %v246
        %v386 = vunpack.c.l.b16 %v247
        %v387 = vunpack.c.l.b16 %v248
        %v388 = vunpack.c.l.b16 %v249
        %v389 = vunpack.c.l.b16 %v250
        %v390 = vunpack.c.l.b16 %v251
        %v391 = vunpack.c.l.b16 %v252
        %v392 = vunpack.c.l.b16 %v253
        %v393 = vunpack.c.l.b16 %v254
        %v394 = vunpack.c.l.b16 %v255
        %v395 = vunpack.c.l.b16 %v256
        %v396 = vunpack.c.l.b16 %v257
        %v397 = vunpack.c.l.b16 %v258
        %v398 = vunpack.c.l.b16 %v259
        %v399 = vunpack.c.l.b16 %v260
        %v400 = vunpack.c.l.b16 %v261
        %v401 = vunpack.c.l.b16 %v262
        %v402 = vunpack.c.l.b16 %v263
        %v403 = vunpack.c.l.b16 %v264
        %v404 = vunpack.c.l.b16 %v265
        %v405 = vunpack.c.l.b16 %v266
        %v406 = vunpack.c.l.b16 %v267
        %v407 = vunpack.c.l.b16 %v268
        %v408 = vunpack.c.l.b16 %v269
        %v409 = vunpack.c.l.b16 %v270
        %v410 = vunpack.c.l.b16 %v271
        %v411 = vunpack.c.l.b16 %v272
        %v412 = vunpack.c.l.b16 %v273
        %v413 = vunpack.c.l.b16 %v274
        %v414 = vunpack.c.l.b16 %v275
        %v415 = vunpack.c.l.b16 %v276
        %v416 = vunpack.c.l.b16 %v277
        %v417 = vunpack.c.l.b16 %v278
        %v418 = vunpack.c.l.b16 %v279
        %v419 = vunpack.c.l.b16 %v280
        %v420 = vunpack.c.l.b16 %v281
        %v421 = vpack.c.b16 %v358, %v357
        %v422 = vpack.c.b16 %v360, %v359
        %v423 = vpack.c.b16 %v362, %v361
        %v424 = vpack.c.b16 %v364, %v363
        %v425 = vpack.c.b16 %v366, %v365
        %v426 = vpack.c.b16 %v368, %v367
        %v427 = vpack.c.b16 %v370, %v369
        %v428 = vpack.c.b16 %v372, %v371
        %v429 = vpack.c.b16 %v374, %v373
        %v430 = vpack.c.b16 %v376, %v375
        %v431 = vpack.c.b16 %v378, %v377
        %v432 = vpack.c.b16 %v380, %v379
        %v433 = vpack.c.b16 %v382, %v381
        %v434 = vpack.c.b16 %v384, %v383
        %v435 = vpack.c.b16 %v386, %v385
        %v436 = vpack.c.b16 %v388, %v387
        %v437 = vpack.c.b16 %v390, %v389
        %v438 = vpack.c.b16 %v392, %v391
        %v439 = vpack.c.b16 %v394, %v393
        %v440 = vpack.c.b16 %v396, %v395
        %v441 = vpack.c.b16 %v398, %v397
        %v442 = vpack.c.b16 %v400, %v399
        %v443 = vpack.c.b16 %v402, %v401
        %v444 = vpack.c.b16 %v404, %v403
        %v445 = vpack.c.b16 %v406, %v405
        %v446 = vpack.c.b16 %v408, %v407
        %v447 = vpack.c.b16 %v410, %v409
        %v448 = vpack.c.b16 %v412, %v411
        %v449 = vpack.c.b16 %v414, %v413
        %v450 = vpack.c.b16 %v416, %v415
        %v451 = vpack.c.b16 %v418, %v417
        %v452 = vpack.c.b16 %v420, %v419
        %v457 = vunpack.c.l.b16 %v282
        %v458 = vunpack.c.l.b16 %v283
        %v459 = vunpack.c.l.b16 %v284
        %v460 = vunpack.c.l.b16 %v285
        %v461 = vpack.c.b16 %v458, %v457
        %v462 = vpack.c.b16 %v460, %v459
        %vm464 = vcmask 220160
        %v466 = vsel %vm464, %v421, 0
        %v469 = vsel %vm464, %v422, 0
        %v472 = vsel %vm464, %v423, 0
        %v475 = vsel %vm464, %v424, 0
        %v478 = vsel %vm464, %v425, 0
        %v481 = vsel %vm464, %v426, 0
        %v484 = vsel %vm464, %v427, 0
        %v487 = vsel %vm464, %v428, 0
        %v490 = vsel %vm464, %v429, 0
        %v493 = vsel %vm464, %v430, 0
        %v496 = vsel %vm464, %v431, 0
        %v499 = vsel %vm464, %v432, 0
        %v502 = vsel %vm464, %v433, 0
        %v505 = vsel %vm464, %v434, 0
        %v508 = vsel %vm464, %v435, 0
        %v511 = vsel %vm464, %v436, 0
        %v514 = vsel %vm464, %v437, 0
        %v517 = vsel %vm464, %v438, 0
        %v520 = vsel %vm464, %v439, 0
        %v523 = vsel %vm464, %v440, 0
        %v526 = vsel %vm464, %v441, 0
        %v529 = vsel %vm464, %v442, 0
        %v532 = vsel %vm464, %v443, 0
        %v535 = vsel %vm464, %v444, 0
        %v538 = vsel %vm464, %v445, 0
        %v541 = vsel %vm464, %v446, 0
        %v544 = vsel %vm464, %v447, 0
        %v547 = vsel %vm464, %v448, 0
        %v550 = vsel %vm464, %v449, 0
        %v553 = vsel %vm464, %v450, 0
        %v556 = vsel %vm464, %v451, 0
        %v559 = vsel %vm464, %v452, 0
        %vm561 = vcmask 1044480
        %vm562 = vcmask 1045504
        %v563 = vsel %vm561, 4294967295, 65535
        %v564 = vsel %vm562, %v563, 0
        %v566 = vand.u32 %v462, %v564
        %568 = vmatprep.subr.bf16.mxu0 0
        %569 = vmatpush1.bf16.msra.mxu0 %v461
        %570 = vmatprep.subr.bf16.mxu0 0
        %571 = vmatpush1.bf16.msra.mxu0 %v566
        %572 = vmatprep.subr.bf16.mxu0 0
        %573 = vmatpush1.bf16.msra.mxu0 0
        %574 = vmatprep.subr.bf16.mxu0 0
        %575 = vmatpush1.bf16.msra.mxu0 0
        %576 = vmatprep.subr.bf16.mxu0 0
        %577 = vmatpush1.bf16.msra.mxu0 0
        %578 = vmatprep.subr.bf16.mxu0 0
        %579 = vmatpush1.bf16.msra.mxu0 0
        %580 = vmatprep.subr.bf16.mxu0 0
        %581 = vmatpush1.bf16.msra.mxu0 0
        %582 = vmatprep.subr.bf16.mxu0 0
        %583 = vmatpush1.bf16.msra.mxu0 0
        %584 = vmatprep.subr.bf16.mxu0 0
        %585 = vmatpush1.bf16.msra.mxu0 0
        %586 = vmatprep.subr.bf16.mxu0 0
        %587 = vmatpush1.bf16.msra.mxu0 0
        %588 = vmatprep.subr.bf16.mxu0 0
        %589 = vmatpush1.bf16.msra.mxu0 0
        %590 = vmatprep.subr.bf16.mxu0 0
        %591 = vmatpush1.bf16.msra.mxu0 0
        %592 = vmatprep.subr.bf16.mxu0 0
        %593 = vmatpush1.bf16.msra.mxu0 0
        %594 = vmatprep.subr.bf16.mxu0 0
        %595 = vmatpush1.bf16.msra.mxu0 0
        %596 = vmatprep.subr.bf16.mxu0 0
        %597 = vmatpush1.bf16.msra.mxu0 0
        %598 = vmatprep.subr.bf16.mxu0 0
        %599 = vmatpush1.bf16.msra.mxu0 0
        %600 = vmatprep.mubr.bf16.mxu0 0
        %601 = vmatmul.mubr.bf16.gmra.mrb[0].mxu0 %v466
        %v602 = vpop.f32.mrb[0].mxu0
        %v603 = vadd.f32 %v291, %v602
        %v604 = vpop.f32.mrb[0].mxu0
        %v605 = vpop.f32.mrb[0].mxu0
        %v606 = vadd.f32 %v291, %v605
        %v607 = vpop.f32.mrb[0].mxu0
        %608 = vmatprep.mubr.bf16.mxu0 0
        %609 = vmatmul.mubr.bf16.gmra.mrb[0].mxu0 %v469
        %v610 = vpop.f32.mrb[0].mxu0
        %v611 = vadd.f32 %v291, %v610
        %v612 = vpop.f32.mrb[0].mxu0
        %v613 = vpop.f32.mrb[0].mxu0
        %v614 = vadd.f32 %v291, %v613
        %v615 = vpop.f32.mrb[0].mxu0
        %616 = vmatprep.mubr.bf16.mxu0 0
        %617 = vmatmul.mubr.bf16.gmra.mrb[0].mxu0 %v472
        %v618 = vpop.f32.mrb[0].mxu0
        %v619 = vadd.f32 %v291, %v618
        %v620 = vpop.f32.mrb[0].mxu0
        %v621 = vpop.f32.mrb[0].mxu0
        %v622 = vadd.f32 %v291, %v621
        %v623 = vpop.f32.mrb[0].mxu0
        %624 = vmatprep.mubr.bf16.mxu0 0
        %625 = vmatmul.mubr.bf16.gmra.mrb[0].mxu0 %v475
        %v626 = vpop.f32.mrb[0].mxu0
        %v627 = vadd.f32 %v291, %v626
        %v628 = vpop.f32.mrb[0].mxu0
        %v629 = vpop.f32.mrb[0].mxu0
        %v630 = vadd.f32 %v291, %v629
        %v631 = vpop.f32.mrb[0].mxu0
        %632 = vmatprep.mubr.bf16.mxu0 0
        %633 = vmatmul.mubr.bf16.gmra.mrb[0].mxu0 %v478
        %v634 = vpop.f32.mrb[0].mxu0
        %v635 = vadd.f32 %v291, %v634
        %v636 = vpop.f32.mrb[0].mxu0
        %v637 = vpop.f32.mrb[0].mxu0
        %v638 = vadd.f32 %v291, %v637
        %v639 = vpop.f32.mrb[0].mxu0
        %640 = vmatprep.mubr.bf16.mxu0 0
        %641 = vmatmul.mubr.bf16.gmra.mrb[0].mxu0 %v481
        %v642 = vpop.f32.mrb[0].mxu0
        %v643 = vadd.f32 %v291, %v642
        %v644 = vpop.f32.mrb[0].mxu0
        %v645 = vpop.f32.mrb[0].mxu0
        %v646 = vadd.f32 %v291, %v645
        %v647 = vpop.f32.mrb[0].mxu0
        %648 = vmatprep.mubr.bf16.mxu0 0
        %649 = vmatmul.mubr.bf16.gmra.mrb[0].mxu0 %v484
        %v650 = vpop.f32.mrb[0].mxu0
        %v651 = vadd.f32 %v291, %v650
        %v652 = vpop.f32.mrb[0].mxu0
        %v653 = vpop.f32.mrb[0].mxu0
        %v654 = vadd.f32 %v291, %v653
        %v655 = vpop.f32.mrb[0].mxu0
        %656 = vmatprep.mubr.bf16.mxu0 0
        %657 = vmatmul.mubr.bf16.gmra.mrb[0].mxu0 %v487
        %v658 = vpop.f32.mrb[0].mxu0
        %v659 = vadd.f32 %v291, %v658
        %v660 = vpop.f32.mrb[0].mxu0
        %v661 = vpop.f32.mrb[0].mxu0
        %v662 = vadd.f32 %v291, %v661
        %v663 = vpop.f32.mrb[0].mxu0
        %664 = vmatprep.mubr.bf16.mxu0 0
        %665 = vmatmul.mubr.bf16.gmra.mrb[0].mxu0 %v490
        %v666 = vpop.f32.mrb[0].mxu0
        %v667 = vadd.f32 %v291, %v666
        %v668 = vpop.f32.mrb[0].mxu0
        %v669 = vpop.f32.mrb[0].mxu0
        %v670 = vadd.f32 %v291, %v669
        %v671 = vpop.f32.mrb[0].mxu0
        %672 = vmatprep.mubr.bf16.mxu0 0
        %673 = vmatmul.mubr.bf16.gmra.mrb[0].mxu0 %v493
        %v674 = vpop.f32.mrb[0].mxu0
        %v675 = vadd.f32 %v291, %v674
        %v676 = vpop.f32.mrb[0].mxu0
        %v677 = vpop.f32.mrb[0].mxu0
        %v678 = vadd.f32 %v291, %v677
        %v679 = vpop.f32.mrb[0].mxu0
        %680 = vmatprep.mubr.bf16.mxu0 0
        %681 = vmatmul.mubr.bf16.gmra.mrb[0].mxu0 %v496
        %v682 = vpop.f32.mrb[0].mxu0
        %v683 = vadd.f32 %v291, %v682
        %v684 = vpop.f32.mrb[0].mxu0
        %v685 = vpop.f32.mrb[0].mxu0
        %v686 = vadd.f32 %v291, %v685
        %v687 = vpop.f32.mrb[0].mxu0
        %688 = vmatprep.mubr.bf16.mxu0 0
        %689 = vmatmul.mubr.bf16.gmra.mrb[0].mxu0 %v499
        %v690 = vpop.f32.mrb[0].mxu0
        %v691 = vadd.f32 %v291, %v690
        %v692 = vpop.f32.mrb[0].mxu0
        %v693 = vpop.f32.mrb[0].mxu0
        %v694 = vadd.f32 %v291, %v693
        %v695 = vpop.f32.mrb[0].mxu0
        %696 = vmatprep.mubr.bf16.mxu0 0
        %697 = vmatmul.mubr.bf16.gmra.mrb[0].mxu0 %v502
        %v698 = vpop.f32.mrb[0].mxu0
        %v699 = vadd.f32 %v291, %v698
        %v700 = vpop.f32.mrb[0].mxu0
        %v701 = vpop.f32.mrb[0].mxu0
        %v702 = vadd.f32 %v291, %v701
        %v703 = vpop.f32.mrb[0].mxu0
        %704 = vmatprep.mubr.bf16.mxu0 0
        %705 = vmatmul.mubr.bf16.gmra.mrb[0].mxu0 %v505
        %v706 = vpop.f32.mrb[0].mxu0
        %v707 = vadd.f32 %v291, %v706
        %v708 = vpop.f32.mrb[0].mxu0
        %v709 = vpop.f32.mrb[0].mxu0
        %v710 = vadd.f32 %v291, %v709
        %v711 = vpop.f32.mrb[0].mxu0
        %712 = vmatprep.mubr.bf16.mxu0 0
        %713 = vmatmul.mubr.bf16.gmra.mrb[0].mxu0 %v508
        %v714 = vpop.f32.mrb[0].mxu0
        %v715 = vadd.f32 %v291, %v714
        %v716 = vpop.f32.mrb[0].mxu0
        %v717 = vpop.f32.mrb[0].mxu0
        %v718 = vadd.f32 %v291, %v717
        %v719 = vpop.f32.mrb[0].mxu0
        %720 = vmatprep.mubr.bf16.mxu0 0
        %721 = vmatmul.mubr.bf16.gmra.mrb[0].mxu0 %v511
        %v722 = vpop.f32.mrb[0].mxu0
        %v723 = vadd.f32 %v291, %v722
        %v724 = vpop.f32.mrb[0].mxu0
        %v725 = vpop.f32.mrb[0].mxu0
        %v726 = vadd.f32 %v291, %v725
        %v727 = vpop.f32.mrb[0].mxu0
        %728 = vmatprep.mubr.bf16.mxu0 0
        %729 = vmatmul.mubr.bf16.gmra.mrb[0].mxu0 %v514
        %v730 = vpop.f32.mrb[0].mxu0
        %v731 = vadd.f32 %v291, %v730
        %v732 = vpop.f32.mrb[0].mxu0
        %v733 = vpop.f32.mrb[0].mxu0
        %v734 = vadd.f32 %v291, %v733
        %v735 = vpop.f32.mrb[0].mxu0
        %736 = vmatprep.mubr.bf16.mxu0 0
        %737 = vmatmul.mubr.bf16.gmra.mrb[0].mxu0 %v517
        %v738 = vpop.f32.mrb[0].mxu0
        %v739 = vadd.f32 %v291, %v738
        %v740 = vpop.f32.mrb[0].mxu0
        %v741 = vpop.f32.mrb[0].mxu0
        %v742 = vadd.f32 %v291, %v741
        %v743 = vpop.f32.mrb[0].mxu0
        %744 = vmatprep.mubr.bf16.mxu0 0
        %745 = vmatmul.mubr.bf16.gmra.mrb[0].mxu0 %v520
        %v746 = vpop.f32.mrb[0].mxu0
        %v747 = vadd.f32 %v291, %v746
        %v748 = vpop.f32.mrb[0].mxu0
        %v749 = vpop.f32.mrb[0].mxu0
        %v750 = vadd.f32 %v291, %v749
        %v751 = vpop.f32.mrb[0].mxu0
        %752 = vmatprep.mubr.bf16.mxu0 0
        %753 = vmatmul.mubr.bf16.gmra.mrb[0].mxu0 %v523
        %v754 = vpop.f32.mrb[0].mxu0
        %v755 = vadd.f32 %v291, %v754
        %v756 = vpop.f32.mrb[0].mxu0
        %v757 = vpop.f32.mrb[0].mxu0
        %v758 = vadd.f32 %v291, %v757
        %v759 = vpop.f32.mrb[0].mxu0
        %760 = vmatprep.mubr.bf16.mxu0 0
        %761 = vmatmul.mubr.bf16.gmra.mrb[0].mxu0 %v526
        %v762 = vpop.f32.mrb[0].mxu0
        %v763 = vadd.f32 %v291, %v762
        %v764 = vpop.f32.mrb[0].mxu0
        %v765 = vpop.f32.mrb[0].mxu0
        %v766 = vadd.f32 %v291, %v765
        %v767 = vpop.f32.mrb[0].mxu0
        %768 = vmatprep.mubr.bf16.mxu0 0
        %769 = vmatmul.mubr.bf16.gmra.mrb[0].mxu0 %v529
        %v770 = vpop.f32.mrb[0].mxu0
        %v771 = vadd.f32 %v291, %v770
        %v772 = vpop.f32.mrb[0].mxu0
        %v773 = vpop.f32.mrb[0].mxu0
        %v774 = vadd.f32 %v291, %v773
        %v775 = vpop.f32.mrb[0].mxu0
        %776 = vmatprep.mubr.bf16.mxu0 0
        %777 = vmatmul.mubr.bf16.gmra.mrb[0].mxu0 %v532
        %v778 = vpop.f32.mrb[0].mxu0
        %v779 = vadd.f32 %v291, %v778
        %v780 = vpop.f32.mrb[0].mxu0
        %v781 = vpop.f32.mrb[0].mxu0
        %v782 = vadd.f32 %v291, %v781
        %v783 = vpop.f32.mrb[0].mxu0
        %784 = vmatprep.mubr.bf16.mxu0 0
        %785 = vmatmul.mubr.bf16.gmra.mrb[0].mxu0 %v535
        %v786 = vpop.f32.mrb[0].mxu0
        %v787 = vadd.f32 %v291, %v786
        %v788 = vpop.f32.mrb[0].mxu0
        %v789 = vpop.f32.mrb[0].mxu0
        %v790 = vadd.f32 %v291, %v789
        %v791 = vpop.f32.mrb[0].mxu0
        %792 = vmatprep.mubr.bf16.mxu0 0
        %793 = vmatmul.mubr.bf16.gmra.mrb[0].mxu0 %v538
        %v794 = vpop.f32.mrb[0].mxu0
        %v795 = vadd.f32 %v291, %v794
        %v796 = vpop.f32.mrb[0].mxu0
        %v797 = vpop.f32.mrb[0].mxu0
        %v798 = vadd.f32 %v291, %v797
        %v799 = vpop.f32.mrb[0].mxu0
        %800 = vmatprep.mubr.bf16.mxu0 0
        %801 = vmatmul.mubr.bf16.gmra.mrb[0].mxu0 %v541
        %v802 = vpop.f32.mrb[0].mxu0
        %v803 = vadd.f32 %v291, %v802
        %v804 = vpop.f32.mrb[0].mxu0
        %v805 = vpop.f32.mrb[0].mxu0
        %v806 = vadd.f32 %v291, %v805
        %v807 = vpop.f32.mrb[0].mxu0
        %808 = vmatprep.mubr.bf16.mxu0 0
        %809 = vmatmul.mubr.bf16.gmra.mrb[0].mxu0 %v544
        %v810 = vpop.f32.mrb[0].mxu0
        %v811 = vadd.f32 %v291, %v810
        %v812 = vpop.f32.mrb[0].mxu0
        %v813 = vpop.f32.mrb[0].mxu0
        %v814 = vadd.f32 %v291, %v813
        %v815 = vpop.f32.mrb[0].mxu0
        %816 = vmatprep.mubr.bf16.mxu0 0
        %817 = vmatmul.mubr.bf16.gmra.mrb[0].mxu0 %v547
        %v818 = vpop.f32.mrb[0].mxu0
        %v819 = vadd.f32 %v291, %v818
        %v820 = vpop.f32.mrb[0].mxu0
        %v821 = vpop.f32.mrb[0].mxu0
        %v822 = vadd.f32 %v291, %v821
        %v823 = vpop.f32.mrb[0].mxu0
        %824 = vmatprep.mubr.bf16.mxu0 0
        %825 = vmatmul.mubr.bf16.gmra.mrb[0].mxu0 %v550
        %v826 = vpop.f32.mrb[0].mxu0
        %v827 = vadd.f32 %v291, %v826
        %v828 = vpop.f32.mrb[0].mxu0
        %v829 = vpop.f32.mrb[0].mxu0
        %v830 = vadd.f32 %v291, %v829
        %v831 = vpop.f32.mrb[0].mxu0
        %832 = vmatprep.mubr.bf16.mxu0 0
        %833 = vmatmul.mubr.bf16.gmra.mrb[0].mxu0 %v553
        %v834 = vpop.f32.mrb[0].mxu0
        %v835 = vadd.f32 %v291, %v834
        %v836 = vpop.f32.mrb[0].mxu0
        %v837 = vpop.f32.mrb[0].mxu0
        %v838 = vadd.f32 %v291, %v837
        %v839 = vpop.f32.mrb[0].mxu0
        %840 = vmatprep.mubr.bf16.mxu0 0
        %841 = vmatmul.mubr.bf16.gmra.mrb[0].mxu0 %v556
        %v842 = vpop.f32.mrb[0].mxu0
        %v843 = vadd.f32 %v291, %v842
        %v844 = vpop.f32.mrb[0].mxu0
        %v845 = vpop.f32.mrb[0].mxu0
        %v846 = vadd.f32 %v291, %v845
        %v847 = vpop.f32.mrb[0].mxu0
        %848 = vmatprep.mubr.bf16.mxu0 0
        %849 = vmatmul.mubr.bf16.gmra.mrb[0].mxu0 %v559
        %v850 = vpop.f32.mrb[0].mxu0
        %v851 = vadd.f32 %v291, %v850
        %v852 = vpop.f32.mrb[0].mxu0
        %v853 = vpop.f32.mrb[0].mxu0
        %v854 = vadd.f32 %v291, %v853
        %v855 = vpop.f32.mrb[0].mxu0
        %856 = vdwg.mxu0
        %vm857 = vcmp.gt.f32.partialorder %v603, 0.0
        %vm858 = vcmp.gt.f32.partialorder %v606, 0.0
        %vm859 = vcmp.gt.f32.partialorder %v611, 0.0
        %vm860 = vcmp.gt.f32.partialorder %v614, 0.0
        %vm861 = vcmp.gt.f32.partialorder %v619, 0.0
        %vm862 = vcmp.gt.f32.partialorder %v622, 0.0
        %vm863 = vcmp.gt.f32.partialorder %v627, 0.0
        %vm864 = vcmp.gt.f32.partialorder %v630, 0.0
        %vm865 = vcmp.gt.f32.partialorder %v635, 0.0
        %vm866 = vcmp.gt.f32.partialorder %v638, 0.0
        %vm867 = vcmp.gt.f32.partialorder %v643, 0.0
        %vm868 = vcmp.gt.f32.partialorder %v646, 0.0
        %vm869 = vcmp.gt.f32.partialorder %v651, 0.0
        %vm870 = vcmp.gt.f32.partialorder %v654, 0.0
        %vm871 = vcmp.gt.f32.partialorder %v659, 0.0
        %vm872 = vcmp.gt.f32.partialorder %v662, 0.0
        %vm873 = vcmp.gt.f32.partialorder %v667, 0.0
        %vm874 = vcmp.gt.f32.partialorder %v670, 0.0
        %vm875 = vcmp.gt.f32.partialorder %v675, 0.0
        %vm876 = vcmp.gt.f32.partialorder %v678, 0.0
        %vm877 = vcmp.gt.f32.partialorder %v683, 0.0
        %vm878 = vcmp.gt.f32.partialorder %v686, 0.0
        %vm879 = vcmp.gt.f32.partialorder %v691, 0.0
        %vm880 = vcmp.gt.f32.partialorder %v694, 0.0
        %vm881 = vcmp.gt.f32.partialorder %v699, 0.0
        %vm882 = vcmp.gt.f32.partialorder %v702, 0.0
        %vm883 = vcmp.gt.f32.partialorder %v707, 0.0
        %vm884 = vcmp.gt.f32.partialorder %v710, 0.0
        %vm885 = vcmp.gt.f32.partialorder %v715, 0.0
        %vm886 = vcmp.gt.f32.partialorder %v718, 0.0
        %vm887 = vcmp.gt.f32.partialorder %v723, 0.0
        %vm888 = vcmp.gt.f32.partialorder %v726, 0.0
        %vm889 = vcmp.gt.f32.partialorder %v731, 0.0
        %vm890 = vcmp.gt.f32.partialorder %v734, 0.0
        %vm891 = vcmp.gt.f32.partialorder %v739, 0.0
        %vm892 = vcmp.gt.f32.partialorder %v742, 0.0
        %vm893 = vcmp.gt.f32.partialorder %v747, 0.0
        %vm894 = vcmp.gt.f32.partialorder %v750, 0.0
        %vm895 = vcmp.gt.f32.partialorder %v755, 0.0
        %vm896 = vcmp.gt.f32.partialorder %v758, 0.0
        %vm897 = vcmp.gt.f32.partialorder %v763, 0.0
        %vm898 = vcmp.gt.f32.partialorder %v766, 0.0
        %vm899 = vcmp.gt.f32.partialorder %v771, 0.0
        %vm900 = vcmp.gt.f32.partialorder %v774, 0.0
        %vm901 = vcmp.gt.f32.partialorder %v779, 0.0
        %vm902 = vcmp.gt.f32.partialorder %v782, 0.0
        %vm903 = vcmp.gt.f32.partialorder %v787, 0.0
        %vm904 = vcmp.gt.f32.partialorder %v790, 0.0
        %vm905 = vcmp.gt.f32.partialorder %v795, 0.0
        %vm906 = vcmp.gt.f32.partialorder %v798, 0.0
        %vm907 = vcmp.gt.f32.partialorder %v803, 0.0
        %vm908 = vcmp.gt.f32.partialorder %v806, 0.0
        %vm909 = vcmp.gt.f32.partialorder %v811, 0.0
        %vm910 = vcmp.gt.f32.partialorder %v814, 0.0
        %vm911 = vcmp.gt.f32.partialorder %v819, 0.0
        %vm912 = vcmp.gt.f32.partialorder %v822, 0.0
        %vm913 = vcmp.gt.f32.partialorder %v827, 0.0
        %vm914 = vcmp.gt.f32.partialorder %v830, 0.0
        %vm915 = vcmp.gt.f32.partialorder %v835, 0.0
        %vm916 = vcmp.gt.f32.partialorder %v838, 0.0
        %vm917 = vcmp.gt.f32.partialorder %v843, 0.0
        %vm918 = vcmp.gt.f32.partialorder %v846, 0.0
        %vm919 = vcmp.gt.f32.partialorder %v851, 0.0
        %vm920 = vcmp.gt.f32.partialorder %v854, 0.0
        %v921 = vmul.f32 %v603, 0.1
        %v922 = vmul.f32 %v606, 0.1
        %v923 = vmul.f32 %v611, 0.1
        %v924 = vmul.f32 %v614, 0.1
        %v925 = vmul.f32 %v619, 0.1
        %v926 = vmul.f32 %v622, 0.1
        %v927 = vmul.f32 %v627, 0.1
        %v928 = vmul.f32 %v630, 0.1
        %v929 = vmul.f32 %v635, 0.1
        %v930 = vmul.f32 %v638, 0.1
        %v931 = vmul.f32 %v643, 0.1
        %v932 = vmul.f32 %v646, 0.1
        %v933 = vmul.f32 %v651, 0.1
        %v934 = vmul.f32 %v654, 0.1
        %v935 = vmul.f32 %v659, 0.1
        %v936 = vmul.f32 %v662, 0.1
        %v937 = vmul.f32 %v667, 0.1
        %v938 = vmul.f32 %v670, 0.1
        %v939 = vmul.f32 %v675, 0.1
        %v940 = vmul.f32 %v678, 0.1
        %v941 = vmul.f32 %v683, 0.1
        %v942 = vmul.f32 %v686, 0.1
        %v943 = vmul.f32 %v691, 0.1
        %v944 = vmul.f32 %v694, 0.1
        %v945 = vmul.f32 %v699, 0.1
        %v946 = vmul.f32 %v702, 0.1
        %v947 = vmul.f32 %v707, 0.1
        %v948 = vmul.f32 %v710, 0.1
        %v949 = vmul.f32 %v715, 0.1
        %v950 = vmul.f32 %v718, 0.1
        %v951 = vmul.f32 %v723, 0.1
        %v952 = vmul.f32 %v726, 0.1
        %v953 = vmul.f32 %v731, 0.1
        %v954 = vmul.f32 %v734, 0.1
        %v955 = vmul.f32 %v739, 0.1
        %v956 = vmul.f32 %v742, 0.1
        %v957 = vmul.f32 %v747, 0.1
        %v958 = vmul.f32 %v750, 0.1
        %v959 = vmul.f32 %v755, 0.1
        %v960 = vmul.f32 %v758, 0.1
        %v961 = vmul.f32 %v763, 0.1
        %v962 = vmul.f32 %v766, 0.1
        %v963 = vmul.f32 %v771, 0.1
        %v964 = vmul.f32 %v774, 0.1
        %v965 = vmul.f32 %v779, 0.1
        %v966 = vmul.f32 %v782, 0.1
        %v967 = vmul.f32 %v787, 0.1
        %v968 = vmul.f32 %v790, 0.1
        %v969 = vmul.f32 %v795, 0.1
        %v970 = vmul.f32 %v798, 0.1
        %v971 = vmul.f32 %v803, 0.1
        %v972 = vmul.f32 %v806, 0.1
        %v973 = vmul.f32 %v811, 0.1
        %v974 = vmul.f32 %v814, 0.1
        %v975 = vmul.f32 %v819, 0.1
        %v976 = vmul.f32 %v822, 0.1
        %v977 = vmul.f32 %v827, 0.1
        %v978 = vmul.f32 %v830, 0.1
        %v979 = vmul.f32 %v835, 0.1
        %v980 = vmul.f32 %v838, 0.1
        %v981 = vmul.f32 %v843, 0.1
        %v982 = vmul.f32 %v846, 0.1
        %v983 = vmul.f32 %v851, 0.1
        %v984 = vmul.f32 %v854, 0.1
        %v985 = vsel %vm857, %v603, %v921
        %v986 = vsel %vm858, %v606, %v922
        %v987 = vsel %vm859, %v611, %v923
        %v988 = vsel %vm860, %v614, %v924
        %v989 = vsel %vm861, %v619, %v925
        %v990 = vsel %vm862, %v622, %v926
        %v991 = vsel %vm863, %v627, %v927
        %v992 = vsel %vm864, %v630, %v928
        %v993 = vsel %vm865, %v635, %v929
        %v994 = vsel %vm866, %v638, %v930
        %v995 = vsel %vm867, %v643, %v931
        %v996 = vsel %vm868, %v646, %v932
        %v997 = vsel %vm869, %v651, %v933
        %v998 = vsel %vm870, %v654, %v934
        %v999 = vsel %vm871, %v659, %v935
        %v1000 = vsel %vm872, %v662, %v936
        %v1001 = vsel %vm873, %v667, %v937
        %v1002 = vsel %vm874, %v670, %v938
        %v1003 = vsel %vm875, %v675, %v939
        %v1004 = vsel %vm876, %v678, %v940
        %v1005 = vsel %vm877, %v683, %v941
        %v1006 = vsel %vm878, %v686, %v942
        %v1007 = vsel %vm879, %v691, %v943
        %v1008 = vsel %vm880, %v694, %v944
        %v1009 = vsel %vm881, %v699, %v945
        %v1010 = vsel %vm882, %v702, %v946
        %v1011 = vsel %vm883, %v707, %v947
        %v1012 = vsel %vm884, %v710, %v948
        %v1013 = vsel %vm885, %v715, %v949
        %v1014 = vsel %vm886, %v718, %v950
        %v1015 = vsel %vm887, %v723, %v951
        %v1016 = vsel %vm888, %v726, %v952
        %v1017 = vsel %vm889, %v731, %v953
        %v1018 = vsel %vm890, %v734, %v954
        %v1019 = vsel %vm891, %v739, %v955
        %v1020 = vsel %vm892, %v742, %v956
        %v1021 = vsel %vm893, %v747, %v957
        %v1022 = vsel %vm894, %v750, %v958
        %v1023 = vsel %vm895, %v755, %v959
        %v1024 = vsel %vm896, %v758, %v960
        %v1025 = vsel %vm897, %v763, %v961
        %v1026 = vsel %vm898, %v766, %v962
        %v1027 = vsel %vm899, %v771, %v963
        %v1028 = vsel %vm900, %v774, %v964
        %v1029 = vsel %vm901, %v779, %v965
        %v1030 = vsel %vm902, %v782, %v966
        %v1031 = vsel %vm903, %v787, %v967
        %v1032 = vsel %vm904, %v790, %v968
        %v1033 = vsel %vm905, %v795, %v969
        %v1034 = vsel %vm906, %v798, %v970
        %v1035 = vsel %vm907, %v803, %v971
        %v1036 = vsel %vm908, %v806, %v972
        %v1037 = vsel %vm909, %v811, %v973
        %v1038 = vsel %vm910, %v814, %v974
        %v1039 = vsel %vm911, %v819, %v975
        %v1040 = vsel %vm912, %v822, %v976
        %v1041 = vsel %vm913, %v827, %v977
        %v1042 = vsel %vm914, %v830, %v978
        %v1043 = vsel %vm915, %v835, %v979
        %v1044 = vsel %vm916, %v838, %v980
        %v1045 = vsel %vm917, %v843, %v981
        %v1046 = vsel %vm918, %v846, %v982
        %v1047 = vsel %vm919, %v851, %v983
        %v1048 = vsel %vm920, %v854, %v984
        %v1049 = vpack.c.bf16 %v986, %v985
        %v1050 = vpack.c.bf16 %v988, %v987
        %v1051 = vpack.c.bf16 %v990, %v989
        %v1052 = vpack.c.bf16 %v992, %v991
        %v1053 = vpack.c.bf16 %v994, %v993
        %v1054 = vpack.c.bf16 %v996, %v995
        %v1055 = vpack.c.bf16 %v998, %v997
        %v1056 = vpack.c.bf16 %v1000, %v999
        %v1057 = vpack.c.bf16 %v1002, %v1001
        %v1058 = vpack.c.bf16 %v1004, %v1003
        %v1059 = vpack.c.bf16 %v1006, %v1005
        %v1060 = vpack.c.bf16 %v1008, %v1007
        %v1061 = vpack.c.bf16 %v1010, %v1009
        %v1062 = vpack.c.bf16 %v1012, %v1011
        %v1063 = vpack.c.bf16 %v1014, %v1013
        %v1064 = vpack.c.bf16 %v1016, %v1015
        %v1065 = vpack.c.bf16 %v1018, %v1017
        %v1066 = vpack.c.bf16 %v1020, %v1019
        %v1067 = vpack.c.bf16 %v1022, %v1021
        %v1068 = vpack.c.bf16 %v1024, %v1023
        %v1069 = vpack.c.bf16 %v1026, %v1025
        %v1070 = vpack.c.bf16 %v1028, %v1027
        %v1071 = vpack.c.bf16 %v1030, %v1029
        %v1072 = vpack.c.bf16 %v1032, %v1031
        %v1073 = vpack.c.bf16 %v1034, %v1033
        %v1074 = vpack.c.bf16 %v1036, %v1035
        %v1075 = vpack.c.bf16 %v1038, %v1037
        %v1076 = vpack.c.bf16 %v1040, %v1039
        %v1077 = vpack.c.bf16 %v1042, %v1041
        %v1078 = vpack.c.bf16 %v1044, %v1043
        %v1079 = vpack.c.bf16 %v1046, %v1045
        %v1080 = vpack.c.bf16 %v1048, %v1047
        %v1113 = vunpack.c.l.b16 %v1049
        %v1114 = vunpack.c.h.b16 %v1049
        %v1115 = vunpack.c.l.b16 %v1050
        %v1116 = vunpack.c.h.b16 %v1050
        %v1117 = vunpack.c.l.b16 %v1051
        %v1118 = vunpack.c.h.b16 %v1051
        %v1119 = vunpack.c.l.b16 %v1052
        %v1120 = vunpack.c.h.b16 %v1052
        %v1121 = vunpack.c.l.b16 %v1053
        %v1122 = vunpack.c.h.b16 %v1053
        %v1123 = vunpack.c.l.b16 %v1054
        %v1124 = vunpack.c.h.b16 %v1054
        %v1125 = vunpack.c.l.b16 %v1055
        %v1126 = vunpack.c.h.b16 %v1055
        %v1127 = vunpack.c.l.b16 %v1056
        %v1128 = vunpack.c.h.b16 %v1056
        %v1129 = vunpack.c.l.b16 %v1057
        %v1130 = vunpack.c.h.b16 %v1057
        %v1131 = vunpack.c.l.b16 %v1058
        %v1132 = vunpack.c.h.b16 %v1058
        %v1133 = vunpack.c.l.b16 %v1059
        %v1134 = vunpack.c.h.b16 %v1059
        %v1135 = vunpack.c.l.b16 %v1060
        %v1136 = vunpack.c.h.b16 %v1060
        %v1137 = vunpack.c.l.b16 %v1061
        %v1138 = vunpack.c.h.b16 %v1061
        %v1139 = vunpack.c.l.b16 %v1062
        %v1140 = vunpack.c.h.b16 %v1062
        %v1141 = vunpack.c.l.b16 %v1063
        %v1142 = vunpack.c.h.b16 %v1063
        %v1143 = vunpack.c.l.b16 %v1064
        %v1144 = vunpack.c.h.b16 %v1064
        %v1145 = vunpack.c.l.b16 %v1065
        %v1146 = vunpack.c.h.b16 %v1065
        %v1147 = vunpack.c.l.b16 %v1066
        %v1148 = vunpack.c.h.b16 %v1066
        %v1149 = vunpack.c.l.b16 %v1067
        %v1150 = vunpack.c.h.b16 %v1067
        %v1151 = vunpack.c.l.b16 %v1068
        %v1152 = vunpack.c.h.b16 %v1068
        %v1153 = vunpack.c.l.b16 %v1069
        %v1154 = vunpack.c.h.b16 %v1069
        %v1155 = vunpack.c.l.b16 %v1070
        %v1156 = vunpack.c.h.b16 %v1070
        %v1157 = vunpack.c.l.b16 %v1071
        %v1158 = vunpack.c.h.b16 %v1071
        %v1159 = vunpack.c.l.b16 %v1072
        %v1160 = vunpack.c.h.b16 %v1072
        %v1161 = vunpack.c.l.b16 %v1073
        %v1162 = vunpack.c.h.b16 %v1073
        %v1163 = vunpack.c.l.b16 %v1074
        %v1164 = vunpack.c.h.b16 %v1074
        %v1165 = vunpack.c.l.b16 %v1075
        %v1166 = vunpack.c.h.b16 %v1075
        %v1167 = vunpack.c.l.b16 %v1076
        %v1168 = vunpack.c.h.b16 %v1076
        %v1169 = vunpack.c.l.b16 %v1077
        %v1170 = vunpack.c.h.b16 %v1077
        %v1171 = vunpack.c.l.b16 %v1078
        %v1172 = vunpack.c.h.b16 %v1078
        %v1173 = vunpack.c.l.b16 %v1079
        %v1174 = vunpack.c.h.b16 %v1079
        %v1175 = vunpack.c.l.b16 %v1080
        %v1176 = vunpack.c.h.b16 %v1080
        %v1177 = vpack.c.b16 %v1113, %v1113
        %v1178 = vpack.c.b16 %v1114, %v1114
        %v1179 = vpack.c.b16 %v1115, %v1115
        %v1180 = vpack.c.b16 %v1116, %v1116
        %v1181 = vpack.c.b16 %v1117, %v1117
        %v1182 = vpack.c.b16 %v1118, %v1118
        %v1183 = vpack.c.b16 %v1119, %v1119
        %v1184 = vpack.c.b16 %v1120, %v1120
        %v1185 = vpack.c.b16 %v1121, %v1121
        %v1186 = vpack.c.b16 %v1122, %v1122
        %v1187 = vpack.c.b16 %v1123, %v1123
        %v1188 = vpack.c.b16 %v1124, %v1124
        %v1189 = vpack.c.b16 %v1125, %v1125
        %v1190 = vpack.c.b16 %v1126, %v1126
        %v1191 = vpack.c.b16 %v1127, %v1127
        %v1192 = vpack.c.b16 %v1128, %v1128
        %v1193 = vpack.c.b16 %v1129, %v1129
        %v1194 = vpack.c.b16 %v1130, %v1130
        %v1195 = vpack.c.b16 %v1131, %v1131
        %v1196 = vpack.c.b16 %v1132, %v1132
        %v1197 = vpack.c.b16 %v1133, %v1133
        %v1198 = vpack.c.b16 %v1134, %v1134
        %v1199 = vpack.c.b16 %v1135, %v1135
        %v1200 = vpack.c.b16 %v1136, %v1136
        %v1201 = vpack.c.b16 %v1137, %v1137
        %v1202 = vpack.c.b16 %v1138, %v1138
        %v1203 = vpack.c.b16 %v1139, %v1139
        %v1204 = vpack.c.b16 %v1140, %v1140
        %v1205 = vpack.c.b16 %v1141, %v1141
        %v1206 = vpack.c.b16 %v1142, %v1142
        %v1207 = vpack.c.b16 %v1143, %v1143
        %v1208 = vpack.c.b16 %v1144, %v1144
        %v1209 = vpack.c.b16 %v1145, %v1145
        %v1210 = vpack.c.b16 %v1146, %v1146
        %v1211 = vpack.c.b16 %v1147, %v1147
        %v1212 = vpack.c.b16 %v1148, %v1148
        %v1213 = vpack.c.b16 %v1149, %v1149
        %v1214 = vpack.c.b16 %v1150, %v1150
        %v1215 = vpack.c.b16 %v1151, %v1151
        %v1216 = vpack.c.b16 %v1152, %v1152
        %v1217 = vpack.c.b16 %v1153, %v1153
        %v1218 = vpack.c.b16 %v1154, %v1154
        %v1219 = vpack.c.b16 %v1155, %v1155
        %v1220 = vpack.c.b16 %v1156, %v1156
        %v1221 = vpack.c.b16 %v1157, %v1157
        %v1222 = vpack.c.b16 %v1158, %v1158
        %v1223 = vpack.c.b16 %v1159, %v1159
        %v1224 = vpack.c.b16 %v1160, %v1160
        %v1225 = vpack.c.b16 %v1161, %v1161
        %v1226 = vpack.c.b16 %v1162, %v1162
        %v1227 = vpack.c.b16 %v1163, %v1163
        %v1228 = vpack.c.b16 %v1164, %v1164
        %v1229 = vpack.c.b16 %v1165, %v1165
        %v1230 = vpack.c.b16 %v1166, %v1166
        %v1231 = vpack.c.b16 %v1167, %v1167
        %v1232 = vpack.c.b16 %v1168, %v1168
        %v1233 = vpack.c.b16 %v1169, %v1169
        %v1234 = vpack.c.b16 %v1170, %v1170
        %v1235 = vpack.c.b16 %v1171, %v1171
        %v1236 = vpack.c.b16 %v1172, %v1172
        %v1237 = vpack.c.b16 %v1173, %v1173
        %v1238 = vpack.c.b16 %v1174, %v1174
        %v1239 = vpack.c.b16 %v1175, %v1175
        %v1240 = vpack.c.b16 %v1176, %v1176
        %1305 = vst [vmem:[%s202] sm:$0xf] %v1177
        %1306 = vst [vmem:[%s202 + $0x4] sm:$0xf] %v1178
        %1307 = vst [vmem:[%s202 + $0x8] sm:$0xf] %v1179
        %1308 = vst [vmem:[%s202 + $0xc] sm:$0xf] %v1180
        %1309 = vst [vmem:[%s202 + $0x10] sm:$0xf] %v1181
        %1310 = vst [vmem:[%s202 + $0x14] sm:$0xf] %v1182
        %1311 = vst [vmem:[%s202 + $0x18] sm:$0xf] %v1183
        %1312 = vst [vmem:[%s202 + $0x1c] sm:$0xf] %v1184
        %1313 = vst [vmem:[%s202 + $0x20] sm:$0xf] %v1185
        %1314 = vst [vmem:[%s202 + $0x24] sm:$0xf] %v1186
        %1315 = vst [vmem:[%s202 + $0x28] sm:$0xf] %v1187
        %1316 = vst [vmem:[%s202 + $0x2c] sm:$0xf] %v1188
        %1317 = vst [vmem:[%s202 + $0x30] sm:$0xf] %v1189
        %1318 = vst [vmem:[%s202 + $0x34] sm:$0xf] %v1190
        %1319 = vst [vmem:[%s202 + $0x38] sm:$0xf] %v1191
        %1320 = vst [vmem:[%s202 + $0x3c] sm:$0xf] %v1192
        %1321 = vst [vmem:[%s202 + $0x40] sm:$0xf] %v1193
        %1322 = vst [vmem:[%s202 + $0x44] sm:$0xf] %v1194
        %1323 = vst [vmem:[%s202 + $0x48] sm:$0xf] %v1195
        %1324 = vst [vmem:[%s202 + $0x4c] sm:$0xf] %v1196
        %1325 = vst [vmem:[%s202 + $0x50] sm:$0xf] %v1197
        %1326 = vst [vmem:[%s202 + $0x54] sm:$0xf] %v1198
        %1327 = vst [vmem:[%s202 + $0x58] sm:$0xf] %v1199
        %1328 = vst [vmem:[%s202 + $0x5c] sm:$0xf] %v1200
        %1329 = vst [vmem:[%s202 + $0x60] sm:$0xf] %v1201
        %1330 = vst [vmem:[%s202 + $0x64] sm:$0xf] %v1202
        %1331 = vst [vmem:[%s202 + $0x68] sm:$0xf] %v1203
        %1332 = vst [vmem:[%s202 + $0x6c] sm:$0xf] %v1204
        %1333 = vst [vmem:[%s202 + $0x70] sm:$0xf] %v1205
        %1334 = vst [vmem:[%s202 + $0x74] sm:$0xf] %v1206
        %1335 = vst [vmem:[%s202 + $0x78] sm:$0xf] %v1207
        %1336 = vst [vmem:[%s202 + $0x7c] sm:$0xf] %v1208
        %1337 = vst [vmem:[%s202 + $0x80] sm:$0xf] %v1209
        %1338 = vst [vmem:[%s202 + $0x84] sm:$0xf] %v1210
        %1339 = vst [vmem:[%s202 + $0x88] sm:$0xf] %v1211
        %1340 = vst [vmem:[%s202 + $0x8c] sm:$0xf] %v1212
        %1341 = vst [vmem:[%s202 + $0x90] sm:$0xf] %v1213
        %1342 = vst [vmem:[%s202 + $0x94] sm:$0xf] %v1214
        %1343 = vst [vmem:[%s202 + $0x98] sm:$0xf] %v1215
        %1344 = vst [vmem:[%s202 + $0x9c] sm:$0xf] %v1216
        %1345 = vst [vmem:[%s202 + $0xa0] sm:$0xf] %v1217
        %1346 = vst [vmem:[%s202 + $0xa4] sm:$0xf] %v1218
        %1347 = vst [vmem:[%s202 + $0xa8] sm:$0xf] %v1219
        %1348 = vst [vmem:[%s202 + $0xac] sm:$0xf] %v1220
        %1349 = vst [vmem:[%s202 + $0xb0] sm:$0xf] %v1221
        %1350 = vst [vmem:[%s202 + $0xb4] sm:$0xf] %v1222
        %1351 = vst [vmem:[%s202 + $0xb8] sm:$0xf] %v1223
        %1352 = vst [vmem:[%s202 + $0xbc] sm:$0xf] %v1224
        %1353 = vst [vmem:[%s202 + $0xc0] sm:$0xf] %v1225
        %1354 = vst [vmem:[%s202 + $0xc4] sm:$0xf] %v1226
        %1355 = vst [vmem:[%s202 + $0xc8] sm:$0xf] %v1227
        %1356 = vst [vmem:[%s202 + $0xcc] sm:$0xf] %v1228
        %1357 = vst [vmem:[%s202 + $0xd0] sm:$0xf] %v1229
        %1358 = vst [vmem:[%s202 + $0xd4] sm:$0xf] %v1230
        %1359 = vst [vmem:[%s202 + $0xd8] sm:$0xf] %v1231
        %1360 = vst [vmem:[%s202 + $0xdc] sm:$0xf] %v1232
        %1361 = vst [vmem:[%s202 + $0xe0] sm:$0xf] %v1233
        %1362 = vst [vmem:[%s202 + $0xe4] sm:$0xf] %v1234
        %1363 = vst [vmem:[%s202 + $0xe8] sm:$0xf] %v1235
        %1364 = vst [vmem:[%s202 + $0xec] sm:$0xf] %v1236
        %1365 = vst [vmem:[%s202 + $0xf0] sm:$0xf] %v1237
        %1366 = vst [vmem:[%s202 + $0xf4] sm:$0xf] %v1238
        %1367 = vst [vmem:[%s202 + $0xf8] sm:$0xf] %v1239
        %1368 = vst [vmem:[%s202 + $0xfc] sm:$0xf] %v1240
        %s1369 = sand.u32 %s117, 1
        %s1370 = scalar_lea.sflag [#allocation3], %s1369
        %s1371 = sand.u32 %s117, 1
        %s1372 = smul.addr %s1371, 256
        %s1373 = scalar_lea.vmem [#allocation2], %s1372
        // Predicated region
        $region33: #{tpu_custom_call.1} parent=31 // pred_check
          %p1374 = pneg %p127
        $region34: #{tpu_custom_call.1} parent=31 // pred_check_branch
          %1376 = sbr.rel (%p1374) target = $region36
        $region35: #{tpu_custom_call.1} parent=31 // pred_region
          %s1377 = smul.u32 64, %s21
          %s1379 = ssub.s32 4096, 4096
          %1380 = vsyncadd %s1370, %s1379
          %s1381 = sadd.s32 %s22, %s1377
          %s1382 = smul.addr %s1381, 64
          %s1383 = scalar_lea.hbm %s3, %s1382
          %s1384 = sshll.u32 %s1373, 4
          %s1385 = int_to_ptr.vmem [resolvable:$true] %s1384
          %1390 = dma.vmem_to_hbm [thread:$0]  %s1385, 4096, %s1383, %s1370, 64, 64, 4
        $region36: #{tpu_custom_call.1} parent=31 // pred_fallthru
          _
      $region32: #{tpu_custom_call.1} parent=5 // pred_fallthru
        _
      %p1391 = scmp.le.s32.totalorder 2, %s12
      // Predicated region
      $region37: #{tpu_custom_call.1} parent=5 // pred_check
        %p1392 = pneg %p1391
      $region38: #{tpu_custom_call.1} parent=5 // pred_check_branch
        %1394 = sbr.rel (%p1392) target = $region40
      $region39: #{tpu_custom_call.1} parent=5 // pred_region
        %s1395 = ssub.s32 %s12, 2
        // Predicated region
        $region41: #{tpu_custom_call.1} parent=39 // pred_check
          %p1396 = pneg %p133
        $region42: #{tpu_custom_call.1} parent=39 // pred_check_branch
          %1398 = sbr.rel (%p1396) target = $region44
        $region43: #{tpu_custom_call.1} parent=39 // pred_region
          %s1399 = sand.u32 %s118, 1
          %s1400 = scalar_lea.sflag [#allocation3], %s1399
          %s1401 = sand.u32 %s118, 1
          %s1402 = smul.addr %s1401, 256
          %s1403 = scalar_lea.vmem [#allocation2], %s1402
          %1404 = dma.done %s1400, 4096
        $region44: #{tpu_custom_call.1} parent=39 // pred_fallthru
          _
      $region40: #{tpu_custom_call.1} parent=5 // pred_fallthru
        _
    $region6: #{tpu_custom_call.1} parent=1 // loop_footer
      %s16 = sadd.s32 1, %s12
    $region7: #{tpu_custom_call.1} parent=1 // loop_footer_branch
      %11 = sbr.rel target = $region3
    $region8: #{tpu_custom_call.1} parent=1 // loop_exit
      _
    %1405 = vsyncpa [#allocation3], 1
    %s1406 = scalar_lea.sflag [#allocation3], 1
    %1407 = vsyncpa %s1406, 1

</llo_original>
